<compile_context>
chip_gen: v7x
topology: tpu7x:2x2x1
jax: 0.10.0
libtpu: 0.0.40
codegen_flags: <defaults>
</compile_context>

<pallas_src>
import jax
import jax.numpy as jnp
from jax.experimental import pallas as pl
from jax.experimental.pallas import tpu as pltpu

NEG_SLOPE = 0.01  # nn.LeakyReLU default negative_slope


def _lrelu(x):
    # max(x, a*x) == LeakyReLU(x) for 0 < a < 1; single VALU op, no mask tensor.
    return jnp.maximum(x, NEG_SLOPE * x)


def ctrl_kernel(sup_ref, q_ref, bias0_ref,
                w0_ref, w1_ref, b1_ref, w2_ref, b2_ref,
                w3a_ref, w3b_ref, b3_ref,
                c0w_ref, c0b_ref, c1w_ref, c1b_ref,
                c2v_ref, c2b_ref, out_ref):
    m, _ = sup_ref.shape                  # m = block_q * 2k  (flattened support)
    bq = q_ref.shape[0]                   # block_q queries per grid step
    n_sup = m // bq                       # 2k support rows per query
    k = n_sup // 2
    h = w0_ref.shape[1]

    def mm(a, w_ref):
        # bf16 operands into the MXU, f32 accumulation.
        return jnp.dot(a.astype(jnp.bfloat16), w_ref[...],
                       preferred_element_type=jnp.float32)

    # ---- HyperSetEncoder2 ----
    # fc0; one-hot label columns folded into a per-support-row bias.
    a0 = mm(sup_ref[...], w0_ref)                           # (M, H) f32
    a0 = a0.reshape(bq, n_sup, h) + bias0_ref[...]          # broadcast (2k, H)
    x = _lrelu(a0).reshape(m, h)
    # fc1 / fc2 residual blocks (f32 residuals, bf16 matmul operands)
    x = _lrelu(mm(x, w1_ref) + b1_ref[...]) + x
    x = _lrelu(mm(x, w2_ref) + b2_ref[...]) + x
    # mean-pool first / second half of each query's support set (XLU reduction)
    x3 = x.reshape(bq, n_sup, h)
    p0 = jnp.sum(x3[:, :k, :], axis=1) * (1.0 / k)          # (Bq, H)
    p1 = jnp.sum(x3[:, k:, :], axis=1) * (1.0 / k)          # (Bq, H)
    # fc3 split into two (H,H) matmuls: no cat(p0, p1) buffer
    sup_enc = mm(p0, w3a_ref) + mm(p1, w3b_ref) + b3_ref[...]

    # ---- Ctrl head ----
    y = jnp.concatenate([sup_enc, q_ref[...]], axis=-1)     # (Bq, 2H) f32
    y = _lrelu(mm(y, c0w_ref) + c0b_ref[...]) + y
    y = _lrelu(mm(y, c1w_ref) + c1b_ref[...]) + y
    # FC2 (2H -> 1): broadcast-mul + lane reduce; lane-dense (1, Bq) store.
    scores = jnp.sum(y * c2v_ref[...], axis=-1) + c2b_ref[0]   # (Bq,)
    out_ref[...] = scores.reshape(1, bq)


def ctrl_forward(node_feat, setenc_params, head_params, block_q=None):
    """node_feat: (nq, nd, 128) with nd = 2k+1. Weights in PyTorch (out, in) layout."""
    W0, b0, W1, b1, W2, b2, W3, b3 = setenc_params
    C0, c0, C1, c1, C2, c2 = head_params

    nq, nd, d = node_feat.shape
    assert (nd - 1) % 2 == 0, "nd must be 2k+1"
    k = (nd - 1) // 2
    n_sup = nd - 1
    H = W1.shape[0]          # 128 (setenc hidden)
    H2 = C0.shape[0]         # 256 (ctrl hidden)
    f32, bf16 = jnp.float32, jnp.bfloat16

    # Query tile size. Larger tiles fill the 256x256 MXU (v6e/v7x) and amortize
    # per-step pipeline overhead; keep >= 2 grid steps when nq is large so the
    # ("parallel",) axis can shard across v7x's two TensorCores. Resident
    # buffers are tiny (< 2 MiB), far under scoped VMEM on v5e/v6e/v7x.
    if block_q is None:
        block_q = 128 if nq >= 128 else ((nq + 7) // 8) * 8
    nq_pad = ((nq + block_q - 1) // block_q) * block_q
    node = jnp.asarray(node_feat, f32)
    if nq_pad != nq:
        node = jnp.pad(node, ((0, nq_pad - nq), (0, 0), (0, 0)))

    # Pre-split support / query rows in the wrapper (clean tiles, no in-kernel
    # strided slice of the odd nd axis). Support feeds the MXU -> bf16.
    sup_flat = node[:, :n_sup, :].reshape(nq_pad * n_sup, d).astype(bf16)
    query = node[:, n_sup, :]                                 # (nq_pad, D) f32

    # fc0 bias with label one-hot contribution folded in (tiny: (2k, H)).
    b0n = jnp.asarray(b0 + W0[:, d], f32)        # label [1,0] rows (first k)
    b0p = jnp.asarray(b0 + W0[:, d + 1], f32)    # label [0,1] rows (second k)
    bias0 = jnp.concatenate([jnp.tile(b0n[None, :], (k, 1)),
                             jnp.tile(b0p[None, :], (k, 1))], axis=0)   # (2k, H)

    # Weights pre-transposed to (in, out); matmul operands bf16, biases f32.
    w0t = jnp.asarray(W0[:, :d].T, bf16)                      # (D, H)
    w1t = jnp.asarray(W1.T, bf16)
    b1r = jnp.asarray(b1[None, :], f32)
    w2t = jnp.asarray(W2.T, bf16)
    b2r = jnp.asarray(b2[None, :], f32)
    w3t = jnp.asarray(W3.T, f32)                              # (2H, H)
    w3a = w3t[:H].astype(bf16)                                # multiplies p0
    w3b = w3t[H:].astype(bf16)                                # multiplies p1
    b3r = jnp.asarray(b3[None, :], f32)
    c0t = jnp.asarray(C0.T, bf16)                             # (2H, 2H)
    c0r = jnp.asarray(c0[None, :], f32)
    c1t = jnp.asarray(C1.T, bf16)
    c1r = jnp.asarray(c1[None, :], f32)
    c2v = jnp.asarray(C2, f32)                                # (1, 2H), VPU mul
    c2b = jnp.asarray(c2, f32)                                # (1,) scalar, SMEM

    num_tiles = nq_pad // block_q
    Ms = block_q * n_sup

    out = pl.pallas_call(
        ctrl_kernel,
        out_shape=jax.ShapeDtypeStruct((num_tiles, block_q), f32),
        grid_spec=pltpu.PrefetchScalarGridSpec(
            num_scalar_prefetch=0,
            grid=(num_tiles,),
            in_specs=[
                pl.BlockSpec((Ms, d), lambda i: (i, 0)),        # support rows
                pl.BlockSpec((block_q, d), lambda i: (i, 0)),   # query rows
                pl.BlockSpec((n_sup, H), lambda i: (0, 0)),     # fc0 label bias
                pl.BlockSpec((d, H), lambda i: (0, 0)),         # w0
                pl.BlockSpec((H, H), lambda i: (0, 0)),         # w1
                pl.BlockSpec((1, H), lambda i: (0, 0)),         # b1
                pl.BlockSpec((H, H), lambda i: (0, 0)),         # w2
                pl.BlockSpec((1, H), lambda i: (0, 0)),         # b2
                pl.BlockSpec((H, H), lambda i: (0, 0)),         # w3 (p0 half)
                pl.BlockSpec((H, H), lambda i: (0, 0)),         # w3 (p1 half)
                pl.BlockSpec((1, H), lambda i: (0, 0)),         # b3
                pl.BlockSpec((H2, H2), lambda i: (0, 0)),       # FC0 weight
                pl.BlockSpec((1, H2), lambda i: (0, 0)),        # FC0 bias
                pl.BlockSpec((H2, H2), lambda i: (0, 0)),       # FC1 weight
                pl.BlockSpec((1, H2), lambda i: (0, 0)),        # FC1 bias
                pl.BlockSpec((1, H2), lambda i: (0, 0)),        # FC2 weight row
                pl.BlockSpec(memory_space=pltpu.MemorySpace.SMEM),  # FC2 bias
            ],
            out_specs=pl.BlockSpec((1, block_q), lambda i: (i, 0)),
        ),
        compiler_params=pltpu.CompilerParams(
            dimension_semantics=("parallel",)),
    )(sup_flat, query, bias0, w0t, w1t, b1r, w2t, b2r, w3a, w3b, b3r,
      c0t, c0r, c1t, c1r, c2v, c2b)

    return out.reshape(nq_pad)[:nq].reshape(nq, 1)


def ctrl_reference(node_feat, setenc_params, head_params):
    """Pure-JAX f32 reference of the PyTorch forward (defaults: no BN, no dropout)."""
    W0, b0, W1, b1, W2, b2, W3, b3 = setenc_params
    C0, c0, C1, c1, C2, c2 = head_params
    nq, nd, d = node_feat.shape
    k = (nd - 1) // 2
    lr = lambda v: jnp.where(v > 0, v, NEG_SLOPE * v)

    # HyperSetEncoder2.cat_label
    l0 = jnp.zeros((nq, k, 1), jnp.float32)
    l1 = jnp.ones((nq, k, 1), jnp.float32)
    ln = jnp.concatenate([l1, l0], -1)
    lp = jnp.concatenate([l0, l1], -1)
    ls = jnp.concatenate([ln, lp], 1)
    nf = jnp.concatenate([node_feat[:, :-1, :], ls], -1)        # (nq, 2k, 130)

    # HyperSetEncoder2.forward
    x = lr(nf @ W0.T + b0)
    x = lr(x @ W1.T + b1) + x
    x = lr(x @ W2.T + b2) + x
    p0 = jnp.mean(x[:, :k, :], axis=1)
    p1 = jnp.mean(x[:, k:, :], axis=1)
    sup = jnp.concatenate([p0, p1], -1) @ W3.T + b3

    # Ctrl head
    y = jnp.concatenate([sup, node_feat[:, -1, :]], -1)
    y = lr(y @ C0.T + c0) + y
    y = lr(y @ C1.T + c1) + y
    return y @ C2.T + c2                                        # (nq, 1)


if __name__ == "__main__":
    nq = 4                 # number of query rows (batch)
    k = 4                  # support pairs per query  -> nd = 2k + 1 = 9
    d = 128                # node feature dim (fixed by the module: 128+2 input)
    nd = 2 * k + 1
    hidden_set = 128       # HyperSetEncoder2 hidden_dim / out_dim
    hidden_ctrl = 256      # Ctrl inp_dim / hidden_dim

    key = jax.random.PRNGKey(0)
    keys = jax.random.split(key, 16)
    node_feat = jax.random.normal(keys[0], (nq, nd, d), jnp.float32)

    def mk(kk, shape):
        return 0.1 * jax.random.normal(kk, shape, jnp.float32)

    # HyperSetEncoder2 params (PyTorch Linear layout: (out, in))
    W0 = mk(keys[1], (hidden_set, d + 2));          b0 = mk(keys[2], (hidden_set,))
    W1 = mk(keys[3], (hidden_set, hidden_set));     b1 = mk(keys[4], (hidden_set,))
    W2 = mk(keys[5], (hidden_set, hidden_set));     b2 = mk(keys[6], (hidden_set,))
    W3 = mk(keys[7], (hidden_set, 2 * hidden_set)); b3 = mk(keys[8], (hidden_set,))
    # Ctrl head params
    C0 = mk(keys[9], (hidden_ctrl, hidden_ctrl));   c0 = mk(keys[10], (hidden_ctrl,))
    C1 = mk(keys[11], (hidden_ctrl, hidden_ctrl));  c1 = mk(keys[12], (hidden_ctrl,))
    C2 = mk(keys[13], (1, hidden_ctrl));            c2 = mk(keys[14], (1,))

    setenc_params = (W0, b0, W1, b1, W2, b2, W3, b3)
    head_params = (C0, c0, C1, c1, C2, c2)

    out = ctrl_forward(node_feat, setenc_params, head_params)
    out = jax.block_until_ready(out)

    ref = ctrl_reference(node_feat, setenc_params, head_params)
    ref = jax.block_until_ready(ref)

    assert out.shape == (nq, 1), out.shape
    # bf16 matmul operands with f32 accumulation vs an f32 reference: allow a
    # scale-aware tolerance.
    max_err = float(jnp.max(jnp.abs(out - ref)))
    scale = float(jnp.max(jnp.abs(ref)))
    assert max_err <= 5e-2 * scale + 5e-2, (
        f"mismatch vs reference, max abs err {max_err} (ref scale {scale})")
    print("KERNEL_OK")
</pallas_src>

<mosaic_0001>
module attributes {stable_mosaic.version = 11 : i64} {
  func.func @ctrl_kernel(%arg0: i32, %arg1: memref<64x128xbf16, #tpu.memory_space<vmem>>, %arg2: memref<8x128xf32, #tpu.memory_space<vmem>>, %arg3: memref<8x128xf32, #tpu.memory_space<vmem>>, %arg4: memref<128x128xbf16, #tpu.memory_space<vmem>>, %arg5: memref<128x128xbf16, #tpu.memory_space<vmem>>, %arg6: memref<1x128xf32, #tpu.memory_space<vmem>>, %arg7: memref<128x128xbf16, #tpu.memory_space<vmem>>, %arg8: memref<1x128xf32, #tpu.memory_space<vmem>>, %arg9: memref<128x128xbf16, #tpu.memory_space<vmem>>, %arg10: memref<128x128xbf16, #tpu.memory_space<vmem>>, %arg11: memref<1x128xf32, #tpu.memory_space<vmem>>, %arg12: memref<256x256xbf16, #tpu.memory_space<vmem>>, %arg13: memref<1x256xf32, #tpu.memory_space<vmem>>, %arg14: memref<256x256xbf16, #tpu.memory_space<vmem>>, %arg15: memref<1x256xf32, #tpu.memory_space<vmem>>, %arg16: memref<1x256xf32, #tpu.memory_space<vmem>>, %arg17: memref<1xf32, #tpu.memory_space<smem>>, %arg18: memref<1x8xf32, #tpu.memory_space<vmem>>) attributes {dimension_semantics = [#tpu.dimension_semantics<parallel>], iteration_bounds = array<i64: 1>, scalar_prefetch = 0 : i64, scratch_operands = 0 : i64, tpu.core_type = #tpu.core_type<tc>, window_params = [{transform_indices = @transform_0, window_bounds = array<i64: 64, 128>}, {transform_indices = @transform_1, window_bounds = array<i64: 8, 128>}, {pipeline_mode = #tpu.pipeline_mode<synchronous>, transform_indices = @transform_2, window_bounds = array<i64: 8, 128>}, {pipeline_mode = #tpu.pipeline_mode<synchronous>, transform_indices = @transform_3, window_bounds = array<i64: 128, 128>}, {pipeline_mode = #tpu.pipeline_mode<synchronous>, transform_indices = @transform_4, window_bounds = array<i64: 128, 128>}, {pipeline_mode = #tpu.pipeline_mode<synchronous>, transform_indices = @transform_5, window_bounds = array<i64: 1, 128>}, {pipeline_mode = #tpu.pipeline_mode<synchronous>, transform_indices = @transform_6, window_bounds = array<i64: 128, 128>}, {pipeline_mode = #tpu.pipeline_mode<synchronous>, transform_indices = @transform_7, window_bounds = array<i64: 1, 128>}, {pipeline_mode = #tpu.pipeline_mode<synchronous>, transform_indices = @transform_8, window_bounds = array<i64: 128, 128>}, {pipeline_mode = #tpu.pipeline_mode<synchronous>, transform_indices = @transform_9, window_bounds = array<i64: 128, 128>}, {pipeline_mode = #tpu.pipeline_mode<synchronous>, transform_indices = @transform_10, window_bounds = array<i64: 1, 128>}, {pipeline_mode = #tpu.pipeline_mode<synchronous>, transform_indices = @transform_11, window_bounds = array<i64: 256, 256>}, {pipeline_mode = #tpu.pipeline_mode<synchronous>, transform_indices = @transform_12, window_bounds = array<i64: 1, 256>}, {pipeline_mode = #tpu.pipeline_mode<synchronous>, transform_indices = @transform_13, window_bounds = array<i64: 256, 256>}, {pipeline_mode = #tpu.pipeline_mode<synchronous>, transform_indices = @transform_14, window_bounds = array<i64: 1, 256>}, {pipeline_mode = #tpu.pipeline_mode<synchronous>, transform_indices = @transform_15, window_bounds = array<i64: 1, 256>}, {transform_indices = @transform_16, window_bounds = array<i64: 1>}, {transform_indices = @transform_17, window_bounds = array<i64: 1, 8>}]} {
    %c0 = arith.constant 0 : index
    %c0_0 = arith.constant 0 : index
    %0 = vector.load %arg1[%c0, %c0_0] : memref<64x128xbf16, #tpu.memory_space<vmem>>, vector<64x128xbf16>
    %c0_1 = arith.constant 0 : index
    %c0_2 = arith.constant 0 : index
    %1 = vector.load %arg4[%c0_1, %c0_2] : memref<128x128xbf16, #tpu.memory_space<vmem>>, vector<128x128xbf16>
    %cst = arith.constant dense<0.000000e+00> : vector<64x128xf32>
    %2 = tpu.matmul %0, %1, %cst {dimension_numbers = #tpu.dot_dimension_numbers<[1], [0], [0], [1], [0, 0, 1, 1], [], []>} : vector<64x128xbf16>, vector<128x128xbf16>, vector<64x128xf32> -> vector<64x128xf32>
    %3 = vector.shape_cast %2 : vector<64x128xf32> to vector<8x8x128xf32>
    %c0_3 = arith.constant 0 : index
    %c0_4 = arith.constant 0 : index
    %4 = vector.load %arg3[%c0_3, %c0_4] : memref<8x128xf32, #tpu.memory_space<vmem>>, vector<8x128xf32>
    %5 = vector.shape_cast %4 : vector<8x128xf32> to vector<1x8x128xf32>
    %6 = vector.broadcast %5 : vector<1x8x128xf32> to vector<8x8x128xf32>
    %7 = arith.addf %3, %6 : vector<8x8x128xf32>
    %cst_5 = arith.constant 0.00999999977 : f32
    %8 = vector.broadcast %cst_5 : f32 to vector<8x8x128xf32>
    %9 = arith.mulf %8, %7 : vector<8x8x128xf32>
    %10 = arith.maximumf %7, %9 : vector<8x8x128xf32>
    %11 = vector.shape_cast %10 : vector<8x8x128xf32> to vector<64x128xf32>
    %12 = arith.truncf %11 : vector<64x128xf32> to vector<64x128xbf16>
    %c0_6 = arith.constant 0 : index
    %c0_7 = arith.constant 0 : index
    %13 = vector.load %arg5[%c0_6, %c0_7] : memref<128x128xbf16, #tpu.memory_space<vmem>>, vector<128x128xbf16>
    %cst_8 = arith.constant dense<0.000000e+00> : vector<64x128xf32>
    %14 = tpu.matmul %12, %13, %cst_8 {dimension_numbers = #tpu.dot_dimension_numbers<[1], [0], [0], [1], [0, 0, 1, 1], [], []>} : vector<64x128xbf16>, vector<128x128xbf16>, vector<64x128xf32> -> vector<64x128xf32>
    %c0_9 = arith.constant 0 : index
    %c0_10 = arith.constant 0 : index
    %15 = vector.load %arg6[%c0_9, %c0_10] : memref<1x128xf32, #tpu.memory_space<vmem>>, vector<1x128xf32>
    %16 = vector.broadcast %15 : vector<1x128xf32> to vector<64x128xf32>
    %17 = arith.addf %14, %16 : vector<64x128xf32>
    %cst_11 = arith.constant 0.00999999977 : f32
    %18 = vector.broadcast %cst_11 : f32 to vector<64x128xf32>
    %19 = arith.mulf %18, %17 : vector<64x128xf32>
    %20 = arith.maximumf %17, %19 : vector<64x128xf32>
    %21 = arith.addf %20, %11 : vector<64x128xf32>
    %22 = arith.truncf %21 : vector<64x128xf32> to vector<64x128xbf16>
    %c0_12 = arith.constant 0 : index
    %c0_13 = arith.constant 0 : index
    %23 = vector.load %arg7[%c0_12, %c0_13] : memref<128x128xbf16, #tpu.memory_space<vmem>>, vector<128x128xbf16>
    %cst_14 = arith.constant dense<0.000000e+00> : vector<64x128xf32>
    %24 = tpu.matmul %22, %23, %cst_14 {dimension_numbers = #tpu.dot_dimension_numbers<[1], [0], [0], [1], [0, 0, 1, 1], [], []>} : vector<64x128xbf16>, vector<128x128xbf16>, vector<64x128xf32> -> vector<64x128xf32>
    %c0_15 = arith.constant 0 : index
    %c0_16 = arith.constant 0 : index
    %25 = vector.load %arg8[%c0_15, %c0_16] : memref<1x128xf32, #tpu.memory_space<vmem>>, vector<1x128xf32>
    %26 = vector.broadcast %25 : vector<1x128xf32> to vector<64x128xf32>
    %27 = arith.addf %24, %26 : vector<64x128xf32>
    %cst_17 = arith.constant 0.00999999977 : f32
    %28 = vector.broadcast %cst_17 : f32 to vector<64x128xf32>
    %29 = arith.mulf %28, %27 : vector<64x128xf32>
    %30 = arith.maximumf %27, %29 : vector<64x128xf32>
    %31 = arith.addf %30, %21 : vector<64x128xf32>
    %32 = vector.shape_cast %31 : vector<64x128xf32> to vector<8x8x128xf32>
    %33 = vector.extract_strided_slice %32 {offsets = [0, 0, 0], sizes = [8, 4, 128], strides = [1, 1, 1]} : vector<8x8x128xf32> to vector<8x4x128xf32>
    %cst_18 = arith.constant dense<0.000000e+00> : vector<8x128xf32>
    %34 = vector.multi_reduction <add>, %33, %cst_18 [1] : vector<8x4x128xf32> to vector<8x128xf32>
    %cst_19 = arith.constant 2.500000e-01 : f32
    %35 = vector.broadcast %cst_19 : f32 to vector<8x128xf32>
    %36 = arith.mulf %34, %35 : vector<8x128xf32>
    %37 = vector.extract_strided_slice %32 {offsets = [0, 4, 0], sizes = [8, 4, 128], strides = [1, 1, 1]} : vector<8x8x128xf32> to vector<8x4x128xf32>
    %cst_20 = arith.constant dense<0.000000e+00> : vector<8x128xf32>
    %38 = vector.multi_reduction <add>, %37, %cst_20 [1] : vector<8x4x128xf32> to vector<8x128xf32>
    %cst_21 = arith.constant 2.500000e-01 : f32
    %39 = vector.broadcast %cst_21 : f32 to vector<8x128xf32>
    %40 = arith.mulf %38, %39 : vector<8x128xf32>
    %41 = arith.truncf %36 : vector<8x128xf32> to vector<8x128xbf16>
    %c0_22 = arith.constant 0 : index
    %c0_23 = arith.constant 0 : index
    %42 = vector.load %arg9[%c0_22, %c0_23] : memref<128x128xbf16, #tpu.memory_space<vmem>>, vector<128x128xbf16>
    %cst_24 = arith.constant dense<0.000000e+00> : vector<8x128xf32>
    %43 = tpu.matmul %41, %42, %cst_24 {dimension_numbers = #tpu.dot_dimension_numbers<[1], [0], [0], [1], [0, 0, 1, 1], [], []>} : vector<8x128xbf16>, vector<128x128xbf16>, vector<8x128xf32> -> vector<8x128xf32>
    %44 = arith.truncf %40 : vector<8x128xf32> to vector<8x128xbf16>
    %c0_25 = arith.constant 0 : index
    %c0_26 = arith.constant 0 : index
    %45 = vector.load %arg10[%c0_25, %c0_26] : memref<128x128xbf16, #tpu.memory_space<vmem>>, vector<128x128xbf16>
    %cst_27 = arith.constant dense<0.000000e+00> : vector<8x128xf32>
    %46 = tpu.matmul %44, %45, %cst_27 {dimension_numbers = #tpu.dot_dimension_numbers<[1], [0], [0], [1], [0, 0, 1, 1], [], []>} : vector<8x128xbf16>, vector<128x128xbf16>, vector<8x128xf32> -> vector<8x128xf32>
    %47 = arith.addf %43, %46 : vector<8x128xf32>
    %c0_28 = arith.constant 0 : index
    %c0_29 = arith.constant 0 : index
    %48 = vector.load %arg11[%c0_28, %c0_29] : memref<1x128xf32, #tpu.memory_space<vmem>>, vector<1x128xf32>
    %49 = vector.broadcast %48 : vector<1x128xf32> to vector<8x128xf32>
    %50 = arith.addf %47, %49 : vector<8x128xf32>
    %c0_30 = arith.constant 0 : index
    %c0_31 = arith.constant 0 : index
    %51 = vector.load %arg2[%c0_30, %c0_31] : memref<8x128xf32, #tpu.memory_space<vmem>>, vector<8x128xf32>
    %52 = tpu.concatenate %50, %51 in 1 : vector<8x128xf32>, vector<8x128xf32> -> vector<8x256xf32>
    %53 = arith.truncf %52 : vector<8x256xf32> to vector<8x256xbf16>
    %c0_32 = arith.constant 0 : index
    %c0_33 = arith.constant 0 : index
    %54 = vector.load %arg12[%c0_32, %c0_33] : memref<256x256xbf16, #tpu.memory_space<vmem>>, vector<256x256xbf16>
    %cst_34 = arith.constant dense<0.000000e+00> : vector<8x256xf32>
    %55 = tpu.matmul %53, %54, %cst_34 {dimension_numbers = #tpu.dot_dimension_numbers<[1], [0], [0], [1], [0, 0, 1, 1], [], []>} : vector<8x256xbf16>, vector<256x256xbf16>, vector<8x256xf32> -> vector<8x256xf32>
    %c0_35 = arith.constant 0 : index
    %c0_36 = arith.constant 0 : index
    %56 = vector.load %arg13[%c0_35, %c0_36] : memref<1x256xf32, #tpu.memory_space<vmem>>, vector<1x256xf32>
    %57 = vector.broadcast %56 : vector<1x256xf32> to vector<8x256xf32>
    %58 = arith.addf %55, %57 : vector<8x256xf32>
    %cst_37 = arith.constant 0.00999999977 : f32
    %59 = vector.broadcast %cst_37 : f32 to vector<8x256xf32>
    %60 = arith.mulf %59, %58 : vector<8x256xf32>
    %61 = arith.maximumf %58, %60 : vector<8x256xf32>
    %62 = arith.addf %61, %52 : vector<8x256xf32>
    %63 = arith.truncf %62 : vector<8x256xf32> to vector<8x256xbf16>
    %c0_38 = arith.constant 0 : index
    %c0_39 = arith.constant 0 : index
    %64 = vector.load %arg14[%c0_38, %c0_39] : memref<256x256xbf16, #tpu.memory_space<vmem>>, vector<256x256xbf16>
    %cst_40 = arith.constant dense<0.000000e+00> : vector<8x256xf32>
    %65 = tpu.matmul %63, %64, %cst_40 {dimension_numbers = #tpu.dot_dimension_numbers<[1], [0], [0], [1], [0, 0, 1, 1], [], []>} : vector<8x256xbf16>, vector<256x256xbf16>, vector<8x256xf32> -> vector<8x256xf32>
    %c0_41 = arith.constant 0 : index
    %c0_42 = arith.constant 0 : index
    %66 = vector.load %arg15[%c0_41, %c0_42] : memref<1x256xf32, #tpu.memory_space<vmem>>, vector<1x256xf32>
    %67 = vector.broadcast %66 : vector<1x256xf32> to vector<8x256xf32>
    %68 = arith.addf %65, %67 : vector<8x256xf32>
    %cst_43 = arith.constant 0.00999999977 : f32
    %69 = vector.broadcast %cst_43 : f32 to vector<8x256xf32>
    %70 = arith.mulf %69, %68 : vector<8x256xf32>
    %71 = arith.maximumf %68, %70 : vector<8x256xf32>
    %72 = arith.addf %71, %62 : vector<8x256xf32>
    %c0_44 = arith.constant 0 : index
    %c0_45 = arith.constant 0 : index
    %73 = vector.load %arg16[%c0_44, %c0_45] : memref<1x256xf32, #tpu.memory_space<vmem>>, vector<1x256xf32>
    %74 = vector.broadcast %73 : vector<1x256xf32> to vector<8x256xf32>
    %75 = arith.mulf %72, %74 : vector<8x256xf32>
    %cst_46 = arith.constant dense<0.000000e+00> : vector<8xf32>
    %76 = vector.multi_reduction <add>, %75, %cst_46 [1] : vector<8x256xf32> to vector<8xf32>
    %c0_47 = arith.constant 0 : index
    %77 = memref.load %arg17[%c0_47] : memref<1xf32, #tpu.memory_space<smem>>
    %78 = vector.broadcast %77 : f32 to vector<8xf32>
    %79 = arith.addf %76, %78 : vector<8xf32>
    %80 = vector.shape_cast %79 : vector<8xf32> to vector<1x8xf32>
    %c0_48 = arith.constant 0 : index
    %c0_49 = arith.constant 0 : index
    %81 = vector.load %arg18[%c0_48, %c0_49] : memref<1x8xf32, #tpu.memory_space<vmem>>, vector<1x8xf32>
    tpu.vector_store %arg18[%c0_48, %c0_49], %80 {strides = array<i32>} : memref<1x8xf32, #tpu.memory_space<vmem>>, vector<1x8xf32>,
    return
  }
  func.func @transform_0(%arg0: i32) -> (i32, i32) {
    %c0_i32 = arith.constant 0 : i32
    %c0_i32_0 = arith.constant 0 : i32
    return %arg0, %c0_i32 : i32, i32
  }
  func.func @transform_1(%arg0: i32) -> (i32, i32) {
    %c0_i32 = arith.constant 0 : i32
    %c0_i32_0 = arith.constant 0 : i32
    return %arg0, %c0_i32 : i32, i32
  }
  func.func @transform_2(%arg0: i32) -> (i32, i32) {
    %c0_i32 = arith.constant 0 : i32
    %c0_i32_0 = arith.constant 0 : i32
    %c0_i32_1 = arith.constant 0 : i32
    return %c0_i32, %c0_i32_0 : i32, i32
  }
  func.func @transform_3(%arg0: i32) -> (i32, i32) {
    %c0_i32 = arith.constant 0 : i32
    %c0_i32_0 = arith.constant 0 : i32
    %c0_i32_1 = arith.constant 0 : i32
    return %c0_i32, %c0_i32_0 : i32, i32
  }
  func.func @transform_4(%arg0: i32) -> (i32, i32) {
    %c0_i32 = arith.constant 0 : i32
    %c0_i32_0 = arith.constant 0 : i32
    %c0_i32_1 = arith.constant 0 : i32
    return %c0_i32, %c0_i32_0 : i32, i32
  }
  func.func @transform_5(%arg0: i32) -> (i32, i32) {
    %c0_i32 = arith.constant 0 : i32
    %c0_i32_0 = arith.constant 0 : i32
    %c0_i32_1 = arith.constant 0 : i32
    return %c0_i32, %c0_i32_0 : i32, i32
  }
  func.func @transform_6(%arg0: i32) -> (i32, i32) {
    %c0_i32 = arith.constant 0 : i32
    %c0_i32_0 = arith.constant 0 : i32
    %c0_i32_1 = arith.constant 0 : i32
    return %c0_i32, %c0_i32_0 : i32, i32
  }
  func.func @transform_7(%arg0: i32) -> (i32, i32) {
    %c0_i32 = arith.constant 0 : i32
    %c0_i32_0 = arith.constant 0 : i32
    %c0_i32_1 = arith.constant 0 : i32
    return %c0_i32, %c0_i32_0 : i32, i32
  }
  func.func @transform_8(%arg0: i32) -> (i32, i32) {
    %c0_i32 = arith.constant 0 : i32
    %c0_i32_0 = arith.constant 0 : i32
    %c0_i32_1 = arith.constant 0 : i32
    return %c0_i32, %c0_i32_0 : i32, i32
  }
  func.func @transform_9(%arg0: i32) -> (i32, i32) {
    %c0_i32 = arith.constant 0 : i32
    %c0_i32_0 = arith.constant 0 : i32
    %c0_i32_1 = arith.constant 0 : i32
    return %c0_i32, %c0_i32_0 : i32, i32
  }
  func.func @transform_10(%arg0: i32) -> (i32, i32) {
    %c0_i32 = arith.constant 0 : i32
    %c0_i32_0 = arith.constant 0 : i32
    %c0_i32_1 = arith.constant 0 : i32
    return %c0_i32, %c0_i32_0 : i32, i32
  }
  func.func @transform_11(%arg0: i32) -> (i32, i32) {
    %c0_i32 = arith.constant 0 : i32
    %c0_i32_0 = arith.constant 0 : i32
    %c0_i32_1 = arith.constant 0 : i32
    return %c0_i32, %c0_i32_0 : i32, i32
  }
  func.func @transform_12(%arg0: i32) -> (i32, i32) {
    %c0_i32 = arith.constant 0 : i32
    %c0_i32_0 = arith.constant 0 : i32
    %c0_i32_1 = arith.constant 0 : i32
    return %c0_i32, %c0_i32_0 : i32, i32
  }
  func.func @transform_13(%arg0: i32) -> (i32, i32) {
    %c0_i32 = arith.constant 0 : i32
    %c0_i32_0 = arith.constant 0 : i32
    %c0_i32_1 = arith.constant 0 : i32
    return %c0_i32, %c0_i32_0 : i32, i32
  }
  func.func @transform_14(%arg0: i32) -> (i32, i32) {
    %c0_i32 = arith.constant 0 : i32
    %c0_i32_0 = arith.constant 0 : i32
    %c0_i32_1 = arith.constant 0 : i32
    return %c0_i32, %c0_i32_0 : i32, i32
  }
  func.func @transform_15(%arg0: i32) -> (i32, i32) {
    %c0_i32 = arith.constant 0 : i32
    %c0_i32_0 = arith.constant 0 : i32
    %c0_i32_1 = arith.constant 0 : i32
    return %c0_i32, %c0_i32_0 : i32, i32
  }
  func.func @transform_16(%arg0: i32) -> i32 {
    %c0_i32 = arith.constant 0 : i32
    %c0_i32_0 = arith.constant 0 : i32
    return %c0_i32 : i32
  }
  func.func @transform_17(%arg0: i32) -> (i32, i32) {
    %c0_i32 = arith.constant 0 : i32
    %c0_i32_0 = arith.constant 0 : i32
    return %arg0, %c0_i32 : i32, i32
  }
}

</mosaic_0001>

<llo_original>
// kernel: tpu_custom_call.1
$region0: #{tpu_custom_call.1}
  #allocation0 [shape = 'u32[]', space=smem, size = 0x4, offset = 0x4, fixed_abs, tag = 'smem constant byte address 0x4 - core index']
  #allocation1 [shape = 'u32[144,128]{1,0:T(1,128)}', space=vmem, size = 0x12000, scoped, tag = 'internal scratch']
  #allocation2 [shape = 'f32[1]{0:T(128)S(6)}', space=smem, size = 0x200, scoped, tag = 'scoped memory for tpu_custom_call.1']
  %s0 = inlined_call_operand.hbm [shape: bf16[64,128], index: 0, kind: input, shape index: {}]
  %s1 = inlined_call_operand.hbm [shape: f32[8,128], index: 1, kind: input, shape index: {}]
  %s2 = inlined_call_operand.vmem [shape: f32[8,128], index: 2, kind: input, shape index: {}]
  %s3 = inlined_call_operand.hbm [shape: bf16[128,128], index: 3, kind: input, shape index: {}]
  %s4 = inlined_call_operand.hbm [shape: bf16[128,128], index: 4, kind: input, shape index: {}]
  %s5 = inlined_call_operand.vmem [shape: f32[1,128], index: 5, kind: input, shape index: {}]
  %s6 = inlined_call_operand.hbm [shape: bf16[128,128], index: 6, kind: input, shape index: {}]
  %s7 = inlined_call_operand.vmem [shape: f32[1,128], index: 7, kind: input, shape index: {}]
  %s8 = inlined_call_operand.hbm [shape: bf16[128,128], index: 8, kind: input, shape index: {}]
  %s9 = inlined_call_operand.hbm [shape: bf16[128,128], index: 9, kind: input, shape index: {}]
  %s10 = inlined_call_operand.vmem [shape: f32[1,128], index: 10, kind: input, shape index: {}]
  %s11 = inlined_call_operand.hbm [shape: bf16[256,256], index: 11, kind: input, shape index: {}]
  %s12 = inlined_call_operand.vmem [shape: f32[1,256], index: 12, kind: input, shape index: {}]
  %s13 = inlined_call_operand.hbm [shape: bf16[256,256], index: 13, kind: input, shape index: {}]
  %s14 = inlined_call_operand.vmem [shape: f32[1,256], index: 14, kind: input, shape index: {}]
  %s15 = inlined_call_operand.vmem [shape: f32[1,256], index: 15, kind: input, shape index: {}]
  %s16 = inlined_call_operand.<no memory space> [shape: f32[1], index: 16, kind: input, shape index: {}]
  %s17 = inlined_call_operand.hbm [shape: f32[1,8], index: 17, kind: output, shape index: {}]
  %s18 = sld [smem:[#allocation0]]
  $region114: #{tpu_custom_call.1} parent=0
    _
  %s20 = ssub.s32 1, %s18
  %s21 = scalar_select 0, %s20, %s18
  %22 = sst [smem:[#allocation2]] %s16
  $region1: #{tpu_custom_call.1} parent=0
    #allocation3 [shape = 'u8[16384]{0}', space=vmem, size = 0x4000, scoped, tag = 'input window, operand 0, single buffered']
    #allocation4 [shape = 's32[1]{0}', space=sflag, size = 0x4, scoped, tag = 'scoped memory for tpu_custom_call.1']
    #allocation5 [shape = 's32[1]{0}', space=sflag, size = 0x4, scoped, tag = 'scoped memory for tpu_custom_call.1']
    #allocation6 [shape = 'u8[4096]{0}', space=vmem, size = 0x1000, scoped, tag = 'input window, operand 1, single buffered']
    #allocation7 [shape = 's32[1]{0}', space=sflag, size = 0x4, scoped, tag = 'scoped memory for tpu_custom_call.1']
    #allocation8 [shape = 'u8[32768]{0}', space=vmem, size = 0x8000, scoped, tag = 'input window, operand 3, single buffered']
    #allocation9 [shape = 'u8[32768]{0}', space=vmem, size = 0x8000, scoped, tag = 'input window, operand 4, single buffered']
    #allocation10 [shape = 's32[1]{0}', space=sflag, size = 0x4, scoped, tag = 'scoped memory for tpu_custom_call.1']
    #allocation11 [shape = 'u8[32768]{0}', space=vmem, size = 0x8000, scoped, tag = 'input window, operand 6, single buffered']
    #allocation12 [shape = 'u8[32768]{0}', space=vmem, size = 0x8000, scoped, tag = 'input window, operand 8, single buffered']
    #allocation13 [shape = 's32[1]{0}', space=sflag, size = 0x4, scoped, tag = 'scoped memory for tpu_custom_call.1']
    #allocation14 [shape = 'u8[32768]{0}', space=vmem, size = 0x8000, scoped, tag = 'input window, operand 9, single buffered']
    #allocation15 [shape = 'u8[131072]{0}', space=vmem, size = 0x20000, scoped, tag = 'input window, operand 11, single buffered']
    #allocation16 [shape = 's32[1]{0}', space=sflag, size = 0x4, scoped, tag = 'scoped memory for tpu_custom_call.1']
    #allocation17 [shape = 'u8[131072]{0}', space=vmem, size = 0x20000, scoped, tag = 'input window, operand 13, single buffered']
    #allocation18 [shape = 'u8[512]{0}', space=vmem, size = 0x400, scoped, tag = 'output window, operand 0, single buffered']
    %23 = vsyncpa [#allocation4], 0
    %24 = vsyncpa [#allocation7], 0
    %25 = vsyncpa [#allocation10], 0
    %26 = vsyncpa [#allocation13], 0
    %27 = vsyncpa [#allocation16], 0
    %28 = vsyncpa [#allocation5], 0
    // Predicated region
    $region2: #{tpu_custom_call.1} parent=1 // pred_check
      _
    $region3: #{tpu_custom_call.1} parent=1 // pred_check_branch
      %30 = sbr.rel (0) target = $region5
    $region4: #{tpu_custom_call.1} parent=1 // pred_region
      %s32 = ssub.s32 512, 512
      %33 = vsyncadd [#allocation4], %s32
      %s34 = sshll.u32 [#allocation3], 4
      %s35 = int_to_ptr.vmem [resolvable:$true] %s34
      %40 = dma.hbm_to_vmem [thread:$0]  %s0, 512, %s35, [#allocation4], 64, 64, 4
    $region5: #{tpu_custom_call.1} parent=1 // pred_fallthru
      _
    // Predicated region
    $region6: #{tpu_custom_call.1} parent=1 // pred_check
      _
    $region7: #{tpu_custom_call.1} parent=1 // pred_check_branch
      %42 = sbr.rel (0) target = $region9
    $region8: #{tpu_custom_call.1} parent=1 // pred_region
      %s44 = ssub.s32 128, 128
      %45 = vsyncadd [#allocation7], %s44
      %s47 = sshll.u32 [#allocation6], 4
      %s48 = int_to_ptr.vmem [resolvable:$true] %s47
      %50 = dma.hbm_to_vmem [thread:$0]  %s1, 128, %s48, [#allocation7]
    $region9: #{tpu_custom_call.1} parent=1 // pred_fallthru
      _
    // Predicated region
    $region10: #{tpu_custom_call.1} parent=1 // pred_check
      _
    $region11: #{tpu_custom_call.1} parent=1 // pred_check_branch
      %52 = sbr.rel (0) target = $region13
    $region12: #{tpu_custom_call.1} parent=1 // pred_region
      _
    $region13: #{tpu_custom_call.1} parent=1 // pred_fallthru
      _
    // Predicated region
    $region14: #{tpu_custom_call.1} parent=1 // pred_check
      _
    $region15: #{tpu_custom_call.1} parent=1 // pred_check_branch
      %54 = sbr.rel (0) target = $region17
    $region16: #{tpu_custom_call.1} parent=1 // pred_region
      %s56 = ssub.s32 1024, 1024
      %57 = vsyncadd [#allocation7], %s56
      %s58 = sshll.u32 [#allocation8], 4
      %s59 = int_to_ptr.vmem [resolvable:$true] %s58
      %64 = dma.hbm_to_vmem [thread:$0]  %s3, 1024, %s59, [#allocation7], 64, 64, 4
    $region17: #{tpu_custom_call.1} parent=1 // pred_fallthru
      _
    // Predicated region
    $region18: #{tpu_custom_call.1} parent=1 // pred_check
      _
    $region19: #{tpu_custom_call.1} parent=1 // pred_check_branch
      %66 = sbr.rel (0) target = $region21
    $region20: #{tpu_custom_call.1} parent=1 // pred_region
      %s68 = ssub.s32 1024, 1024
      %69 = vsyncadd [#allocation10], %s68
      %s70 = sshll.u32 [#allocation9], 4
      %s71 = int_to_ptr.vmem [resolvable:$true] %s70
      %76 = dma.hbm_to_vmem [thread:$0]  %s4, 1024, %s71, [#allocation10], 64, 64, 4
    $region21: #{tpu_custom_call.1} parent=1 // pred_fallthru
      _
    // Predicated region
    $region22: #{tpu_custom_call.1} parent=1 // pred_check
      _
    $region23: #{tpu_custom_call.1} parent=1 // pred_check_branch
      %78 = sbr.rel (0) target = $region25
    $region24: #{tpu_custom_call.1} parent=1 // pred_region
      _
    $region25: #{tpu_custom_call.1} parent=1 // pred_fallthru
      _
    // Predicated region
    $region26: #{tpu_custom_call.1} parent=1 // pred_check
      _
    $region27: #{tpu_custom_call.1} parent=1 // pred_check_branch
      %80 = sbr.rel (0) target = $region29
    $region28: #{tpu_custom_call.1} parent=1 // pred_region
      %s82 = ssub.s32 1024, 1024
      %83 = vsyncadd [#allocation10], %s82
      %s84 = sshll.u32 [#allocation11], 4
      %s85 = int_to_ptr.vmem [resolvable:$true] %s84
      %90 = dma.hbm_to_vmem [thread:$0]  %s6, 1024, %s85, [#allocation10], 64, 64, 4
    $region29: #{tpu_custom_call.1} parent=1 // pred_fallthru
      _
    // Predicated region
    $region30: #{tpu_custom_call.1} parent=1 // pred_check
      _
    $region31: #{tpu_custom_call.1} parent=1 // pred_check_branch
      %92 = sbr.rel (0) target = $region33
    $region32: #{tpu_custom_call.1} parent=1 // pred_region
      _
    $region33: #{tpu_custom_call.1} parent=1 // pred_fallthru
      _
    // Predicated region
    $region34: #{tpu_custom_call.1} parent=1 // pred_check
      _
    $region35: #{tpu_custom_call.1} parent=1 // pred_check_branch
      %94 = sbr.rel (0) target = $region37
    $region36: #{tpu_custom_call.1} parent=1 // pred_region
      %s96 = ssub.s32 1024, 1024
      %97 = vsyncadd [#allocation13], %s96
      %s98 = sshll.u32 [#allocation12], 4
      %s99 = int_to_ptr.vmem [resolvable:$true] %s98
      %104 = dma.hbm_to_vmem [thread:$0]  %s8, 1024, %s99, [#allocation13], 64, 64, 4
    $region37: #{tpu_custom_call.1} parent=1 // pred_fallthru
      _
    // Predicated region
    $region38: #{tpu_custom_call.1} parent=1 // pred_check
      _
    $region39: #{tpu_custom_call.1} parent=1 // pred_check_branch
      %106 = sbr.rel (0) target = $region41
    $region40: #{tpu_custom_call.1} parent=1 // pred_region
      %s108 = ssub.s32 1024, 1024
      %109 = vsyncadd [#allocation13], %s108
      %s110 = sshll.u32 [#allocation14], 4
      %s111 = int_to_ptr.vmem [resolvable:$true] %s110
      %116 = dma.hbm_to_vmem [thread:$0]  %s9, 1024, %s111, [#allocation13], 64, 64, 4
    $region41: #{tpu_custom_call.1} parent=1 // pred_fallthru
      _
    // Predicated region
    $region42: #{tpu_custom_call.1} parent=1 // pred_check
      _
    $region43: #{tpu_custom_call.1} parent=1 // pred_check_branch
      %118 = sbr.rel (0) target = $region45
    $region44: #{tpu_custom_call.1} parent=1 // pred_region
      _
    $region45: #{tpu_custom_call.1} parent=1 // pred_fallthru
      _
    // Predicated region
    $region46: #{tpu_custom_call.1} parent=1 // pred_check
      _
    $region47: #{tpu_custom_call.1} parent=1 // pred_check_branch
      %120 = sbr.rel (0) target = $region49
    $region48: #{tpu_custom_call.1} parent=1 // pred_region
      %s122 = ssub.s32 4096, 4096
      %123 = vsyncadd [#allocation16], %s122
      %s124 = sshll.u32 [#allocation15], 4
      %s125 = int_to_ptr.vmem [resolvable:$true] %s124
      %130 = dma.hbm_to_vmem [thread:$0]  %s11, 4096, %s125, [#allocation16], 128, 128, 8
    $region49: #{tpu_custom_call.1} parent=1 // pred_fallthru
      _
    // Predicated region
    $region50: #{tpu_custom_call.1} parent=1 // pred_check
      _
    $region51: #{tpu_custom_call.1} parent=1 // pred_check_branch
      %132 = sbr.rel (0) target = $region53
    $region52: #{tpu_custom_call.1} parent=1 // pred_region
      _
    $region53: #{tpu_custom_call.1} parent=1 // pred_fallthru
      _
    // Predicated region
    $region54: #{tpu_custom_call.1} parent=1 // pred_check
      _
    $region55: #{tpu_custom_call.1} parent=1 // pred_check_branch
      %134 = sbr.rel (0) target = $region57
    $region56: #{tpu_custom_call.1} parent=1 // pred_region
      %s136 = ssub.s32 4096, 4096
      %137 = vsyncadd [#allocation16], %s136
      %s138 = sshll.u32 [#allocation17], 4
      %s139 = int_to_ptr.vmem [resolvable:$true] %s138
      %144 = dma.hbm_to_vmem [thread:$0]  %s13, 4096, %s139, [#allocation16], 128, 128, 8
    $region57: #{tpu_custom_call.1} parent=1 // pred_fallthru
      _
    // Predicated region
    $region58: #{tpu_custom_call.1} parent=1 // pred_check
      _
    $region59: #{tpu_custom_call.1} parent=1 // pred_check_branch
      %146 = sbr.rel (0) target = $region61
    $region60: #{tpu_custom_call.1} parent=1 // pred_region
      _
    $region61: #{tpu_custom_call.1} parent=1 // pred_fallthru
      _
    // Predicated region
    $region62: #{tpu_custom_call.1} parent=1 // pred_check
      _
    $region63: #{tpu_custom_call.1} parent=1 // pred_check_branch
      %148 = sbr.rel (0) target = $region65
    $region64: #{tpu_custom_call.1} parent=1 // pred_region
      _
    $region65: #{tpu_custom_call.1} parent=1 // pred_fallthru
      _
    // Predicated region
    $region66: #{tpu_custom_call.1} parent=1 // pred_check
      _
    $region67: #{tpu_custom_call.1} parent=1 // pred_check_branch
      %150 = sbr.rel (0) target = $region69
    $region68: #{tpu_custom_call.1} parent=1 // pred_region
      _
    $region69: #{tpu_custom_call.1} parent=1 // pred_fallthru
      _
    // Predicated region
    $region70: #{tpu_custom_call.1} parent=1 // pred_check
      _
    $region71: #{tpu_custom_call.1} parent=1 // pred_check_branch
      %152 = sbr.rel (0) target = $region73
    $region72: #{tpu_custom_call.1} parent=1 // pred_region
      %153 = dma.done [#allocation4], 512
    $region73: #{tpu_custom_call.1} parent=1 // pred_fallthru
      _
    // Predicated region
    $region74: #{tpu_custom_call.1} parent=1 // pred_check
      _
    $region75: #{tpu_custom_call.1} parent=1 // pred_check_branch
      %155 = sbr.rel (0) target = $region77
    $region76: #{tpu_custom_call.1} parent=1 // pred_region
      %156 = dma.done [#allocation7], 128
    $region77: #{tpu_custom_call.1} parent=1 // pred_fallthru
      _
    // Predicated region
    $region78: #{tpu_custom_call.1} parent=1 // pred_check
      _
    $region79: #{tpu_custom_call.1} parent=1 // pred_check_branch
      %158 = sbr.rel (0) target = $region81
    $region80: #{tpu_custom_call.1} parent=1 // pred_region
      %159 = dma.done [#allocation7], 1024
    $region81: #{tpu_custom_call.1} parent=1 // pred_fallthru
      _
    // Predicated region
    $region82: #{tpu_custom_call.1} parent=1 // pred_check
      _
    $region83: #{tpu_custom_call.1} parent=1 // pred_check_branch
      %161 = sbr.rel (0) target = $region85
    $region84: #{tpu_custom_call.1} parent=1 // pred_region
      %162 = dma.done [#allocation10], 1024
    $region85: #{tpu_custom_call.1} parent=1 // pred_fallthru
      _
    // Predicated region
    $region86: #{tpu_custom_call.1} parent=1 // pred_check
      _
    $region87: #{tpu_custom_call.1} parent=1 // pred_check_branch
      %164 = sbr.rel (0) target = $region89
    $region88: #{tpu_custom_call.1} parent=1 // pred_region
      %165 = dma.done [#allocation10], 1024
    $region89: #{tpu_custom_call.1} parent=1 // pred_fallthru
      _
    // Predicated region
    $region90: #{tpu_custom_call.1} parent=1 // pred_check
      _
    $region91: #{tpu_custom_call.1} parent=1 // pred_check_branch
      %167 = sbr.rel (0) target = $region93
    $region92: #{tpu_custom_call.1} parent=1 // pred_region
      %168 = dma.done [#allocation13], 1024
    $region93: #{tpu_custom_call.1} parent=1 // pred_fallthru
      _
    // Predicated region
    $region94: #{tpu_custom_call.1} parent=1 // pred_check
      _
    $region95: #{tpu_custom_call.1} parent=1 // pred_check_branch
      %170 = sbr.rel (0) target = $region97
    $region96: #{tpu_custom_call.1} parent=1 // pred_region
      %171 = dma.done [#allocation13], 1024
    $region97: #{tpu_custom_call.1} parent=1 // pred_fallthru
      _
    // Predicated region
    $region98: #{tpu_custom_call.1} parent=1 // pred_check
      _
    $region99: #{tpu_custom_call.1} parent=1 // pred_check_branch
      %173 = sbr.rel (0) target = $region101
    $region100: #{tpu_custom_call.1} parent=1 // pred_region
      %174 = dma.done [#allocation16], 4096
    $region101: #{tpu_custom_call.1} parent=1 // pred_fallthru
      _
    // Predicated region
    $region102: #{tpu_custom_call.1} parent=1 // pred_check
      _
    $region103: #{tpu_custom_call.1} parent=1 // pred_check_branch
      %176 = sbr.rel (0) target = $region105
    $region104: #{tpu_custom_call.1} parent=1 // pred_region
      %177 = dma.done [#allocation16], 4096
    $region105: #{tpu_custom_call.1} parent=1 // pred_fallthru
      _
    %v179 = vld [vmem:[#allocation3] sm:$0xf]
    %v180 = vld [vmem:[#allocation3 + $0x4] sm:$0xf]
    %v181 = vld [vmem:[#allocation3 + $0x8] sm:$0xf]
    %v182 = vld [vmem:[#allocation3 + $0xc] sm:$0xf]
    %v183 = vld [vmem:[#allocation3 + $0x10] sm:$0xf]
    %v184 = vld [vmem:[#allocation3 + $0x14] sm:$0xf]
    %v185 = vld [vmem:[#allocation3 + $0x18] sm:$0xf]
    %v186 = vld [vmem:[#allocation3 + $0x1c] sm:$0xf]
    %v187 = vld [vmem:[#allocation8] sm:$0xf]
    %v188 = vld [vmem:[#allocation8 + $0x4] sm:$0xf]
    %v189 = vld [vmem:[#allocation8 + $0x8] sm:$0xf]
    %v190 = vld [vmem:[#allocation8 + $0xc] sm:$0xf]
    %v191 = vld [vmem:[#allocation8 + $0x10] sm:$0xf]
    %v192 = vld [vmem:[#allocation8 + $0x14] sm:$0xf]
    %v193 = vld [vmem:[#allocation8 + $0x18] sm:$0xf]
    %v194 = vld [vmem:[#allocation8 + $0x1c] sm:$0xf]
    %v195 = vld [vmem:[#allocation8 + $0x20] sm:$0xf]
    %v196 = vld [vmem:[#allocation8 + $0x24] sm:$0xf]
    %v197 = vld [vmem:[#allocation8 + $0x28] sm:$0xf]
    %v198 = vld [vmem:[#allocation8 + $0x2c] sm:$0xf]
    %v199 = vld [vmem:[#allocation8 + $0x30] sm:$0xf]
    %v200 = vld [vmem:[#allocation8 + $0x34] sm:$0xf]
    %v201 = vld [vmem:[#allocation8 + $0x38] sm:$0xf]
    %v202 = vld [vmem:[#allocation8 + $0x3c] sm:$0xf]
    %v211 = vunpack.c.l.b16 %v179
    %v212 = vunpack.c.l.b16 %v180
    %v213 = vunpack.c.l.b16 %v181
    %v214 = vunpack.c.l.b16 %v182
    %v215 = vunpack.c.l.b16 %v183
    %v216 = vunpack.c.l.b16 %v184
    %v217 = vunpack.c.l.b16 %v185
    %v218 = vunpack.c.l.b16 %v186
    %v219 = vpack.c.b16 %v212, %v211
    %v220 = vpack.c.b16 %v214, %v213
    %v221 = vpack.c.b16 %v216, %v215
    %v222 = vpack.c.b16 %v218, %v217
    %v243 = vunpack.c.l.b16 %v187
    %v244 = vunpack.c.l.b16 %v188
    %v245 = vunpack.c.l.b16 %v189
    %v246 = vunpack.c.l.b16 %v190
    %v247 = vunpack.c.l.b16 %v191
    %v248 = vunpack.c.l.b16 %v192
    %v249 = vunpack.c.l.b16 %v193
    %v250 = vunpack.c.l.b16 %v194
    %v251 = vunpack.c.l.b16 %v195
    %v252 = vunpack.c.l.b16 %v196
    %v253 = vunpack.c.l.b16 %v197
    %v254 = vunpack.c.l.b16 %v198
    %v255 = vunpack.c.l.b16 %v199
    %v256 = vunpack.c.l.b16 %v200
    %v257 = vunpack.c.l.b16 %v201
    %v258 = vunpack.c.l.b16 %v202
    %v259 = vpack.c.b16 %v244, %v243
    %v260 = vpack.c.b16 %v246, %v245
    %v261 = vpack.c.b16 %v248, %v247
    %v262 = vpack.c.b16 %v250, %v249
    %v263 = vpack.c.b16 %v252, %v251
    %v264 = vpack.c.b16 %v254, %v253
    %v265 = vpack.c.b16 %v256, %v255
    %v266 = vpack.c.b16 %v258, %v257
    %275 = vmatprep.subr.bf16.mxu0 0
    %276 = vmatpush1.bf16.msra.mxu0 %v259
    %277 = vmatprep.subr.bf16.mxu0 0
    %278 = vmatpush1.bf16.msra.mxu0 %v260
    %279 = vmatprep.subr.bf16.mxu0 0
    %280 = vmatpush1.bf16.msra.mxu0 %v261
    %281 = vmatprep.subr.bf16.mxu0 0
    %282 = vmatpush1.bf16.msra.mxu0 %v262
    %283 = vmatprep.subr.bf16.mxu0 0
    %284 = vmatpush1.bf16.msra.mxu0 %v263
    %285 = vmatprep.subr.bf16.mxu0 0
    %286 = vmatpush1.bf16.msra.mxu0 %v264
    %287 = vmatprep.subr.bf16.mxu0 0
    %288 = vmatpush1.bf16.msra.mxu0 %v265
    %289 = vmatprep.subr.bf16.mxu0 0
    %290 = vmatpush1.bf16.msra.mxu0 %v266
    %291 = vmatprep.subr.bf16.mxu0 0
    %292 = vmatpush1.bf16.msra.mxu0 0
    %293 = vmatprep.subr.bf16.mxu0 0
    %294 = vmatpush1.bf16.msra.mxu0 0
    %295 = vmatprep.subr.bf16.mxu0 0
    %296 = vmatpush1.bf16.msra.mxu0 0
    %297 = vmatprep.subr.bf16.mxu0 0
    %298 = vmatpush1.bf16.msra.mxu0 0
    %299 = vmatprep.subr.bf16.mxu0 0
    %300 = vmatpush1.bf16.msra.mxu0 0
    %301 = vmatprep.subr.bf16.mxu0 0
    %302 = vmatpush1.bf16.msra.mxu0 0
    %303 = vmatprep.subr.bf16.mxu0 0
    %304 = vmatpush1.bf16.msra.mxu0 0
    %305 = vmatprep.subr.bf16.mxu0 0
    %306 = vmatpush1.bf16.msra.mxu0 0
    %307 = vmatprep.mubr.bf16.mxu0 0
    %308 = vmatmul.mubr.bf16.gmra.mrb[0].mxu0 %v219
    %v309 = vpop.f32.mrb[0].mxu0
    %v310 = vadd.f32 0.0, %v309
    %v311 = vpop.f32.mrb[0].mxu0
    %v312 = vpop.f32.mrb[0].mxu0
    %v313 = vadd.f32 0.0, %v312
    %v314 = vpop.f32.mrb[0].mxu0
    %315 = vmatprep.mubr.bf16.mxu0 0
    %316 = vmatmul.mubr.bf16.gmra.mrb[0].mxu0 %v220
    %v317 = vpop.f32.mrb[0].mxu0
    %v318 = vadd.f32 0.0, %v317
    %v319 = vpop.f32.mrb[0].mxu0
    %v320 = vpop.f32.mrb[0].mxu0
    %v321 = vadd.f32 0.0, %v320
    %v322 = vpop.f32.mrb[0].mxu0
    %323 = vmatprep.mubr.bf16.mxu0 0
    %324 = vmatmul.mubr.bf16.gmra.mrb[0].mxu0 %v221
    %v325 = vpop.f32.mrb[0].mxu0
    %v326 = vadd.f32 0.0, %v325
    %v327 = vpop.f32.mrb[0].mxu0
    %v328 = vpop.f32.mrb[0].mxu0
    %v329 = vadd.f32 0.0, %v328
    %v330 = vpop.f32.mrb[0].mxu0
    %331 = vmatprep.mubr.bf16.mxu0 0
    %332 = vmatmul.mubr.bf16.gmra.mrb[0].mxu0 %v222
    %v333 = vpop.f32.mrb[0].mxu0
    %v334 = vadd.f32 0.0, %v333
    %v335 = vpop.f32.mrb[0].mxu0
    %v336 = vpop.f32.mrb[0].mxu0
    %v337 = vadd.f32 0.0, %v336
    %v338 = vpop.f32.mrb[0].mxu0
    %339 = vdwg.mxu0
    %v340 = vld [vmem:[%s2] sm:$0xff]
    %v341 = vadd.f32 %v310, %v340
    %v342 = vadd.f32 %v313, %v340
    %v343 = vadd.f32 %v318, %v340
    %v344 = vadd.f32 %v321, %v340
    %v345 = vadd.f32 %v326, %v340
    %v346 = vadd.f32 %v329, %v340
    %v347 = vadd.f32 %v334, %v340
    %v348 = vadd.f32 %v337, %v340
    %v349 = vmul.f32 %v341, 0.01
    %v350 = vmul.f32 %v342, 0.01
    %v351 = vmul.f32 %v343, 0.01
    %v352 = vmul.f32 %v344, 0.01
    %v353 = vmul.f32 %v345, 0.01
    %v354 = vmul.f32 %v346, 0.01
    %v355 = vmul.f32 %v347, 0.01
    %v356 = vmul.f32 %v348, 0.01
    %v357 = vmax.f32 %v341, %v349
    %v358 = vmax.f32 %v342, %v350
    %v359 = vmax.f32 %v343, %v351
    %v360 = vmax.f32 %v344, %v352
    %v361 = vmax.f32 %v345, %v353
    %v362 = vmax.f32 %v346, %v354
    %v363 = vmax.f32 %v347, %v355
    %v364 = vmax.f32 %v348, %v356
    %v365 = vpack.c.bf16 %v358, %v357
    %v366 = vpack.c.bf16 %v360, %v359
    %v367 = vpack.c.bf16 %v362, %v361
    %v368 = vpack.c.bf16 %v364, %v363
    %v369 = vld [vmem:[#allocation9] sm:$0xf]
    %v370 = vld [vmem:[#allocation9 + $0x4] sm:$0xf]
    %v371 = vld [vmem:[#allocation9 + $0x8] sm:$0xf]
    %v372 = vld [vmem:[#allocation9 + $0xc] sm:$0xf]
    %v373 = vld [vmem:[#allocation9 + $0x10] sm:$0xf]
    %v374 = vld [vmem:[#allocation9 + $0x14] sm:$0xf]
    %v375 = vld [vmem:[#allocation9 + $0x18] sm:$0xf]
    %v376 = vld [vmem:[#allocation9 + $0x1c] sm:$0xf]
    %v377 = vld [vmem:[#allocation9 + $0x20] sm:$0xf]
    %v378 = vld [vmem:[#allocation9 + $0x24] sm:$0xf]
    %v379 = vld [vmem:[#allocation9 + $0x28] sm:$0xf]
    %v380 = vld [vmem:[#allocation9 + $0x2c] sm:$0xf]
    %v381 = vld [vmem:[#allocation9 + $0x30] sm:$0xf]
    %v382 = vld [vmem:[#allocation9 + $0x34] sm:$0xf]
    %v383 = vld [vmem:[#allocation9 + $0x38] sm:$0xf]
    %v384 = vld [vmem:[#allocation9 + $0x3c] sm:$0xf]
    %v385 = vld [vmem:[%s5] sm:$0x1]
    %v387 = vlaneseq
    %v388 = vshrl.u32 %v387, 7
    %v389 = vsub.s32 0, %v388
    %v390 = vrot.slane %v385, %v389
    %v408 = vunpack.c.l.b16 %v369
    %v409 = vunpack.c.l.b16 %v370
    %v410 = vunpack.c.l.b16 %v371
    %v411 = vunpack.c.l.b16 %v372
    %v412 = vunpack.c.l.b16 %v373
    %v413 = vunpack.c.l.b16 %v374
    %v414 = vunpack.c.l.b16 %v375
    %v415 = vunpack.c.l.b16 %v376
    %v416 = vunpack.c.l.b16 %v377
    %v417 = vunpack.c.l.b16 %v378
    %v418 = vunpack.c.l.b16 %v379
    %v419 = vunpack.c.l.b16 %v380
    %v420 = vunpack.c.l.b16 %v381
    %v421 = vunpack.c.l.b16 %v382
    %v422 = vunpack.c.l.b16 %v383
    %v423 = vunpack.c.l.b16 %v384
    %v424 = vpack.c.b16 %v409, %v408
    %v425 = vpack.c.b16 %v411, %v410
    %v426 = vpack.c.b16 %v413, %v412
    %v427 = vpack.c.b16 %v415, %v414
    %v428 = vpack.c.b16 %v417, %v416
    %v429 = vpack.c.b16 %v419, %v418
    %v430 = vpack.c.b16 %v421, %v420
    %v431 = vpack.c.b16 %v423, %v422
    %440 = vmatprep.subr.bf16.mxu0 0
    %441 = vmatpush1.bf16.msra.mxu0 %v424
    %442 = vmatprep.subr.bf16.mxu0 0
    %443 = vmatpush1.bf16.msra.mxu0 %v425
    %444 = vmatprep.subr.bf16.mxu0 0
    %445 = vmatpush1.bf16.msra.mxu0 %v426
    %446 = vmatprep.subr.bf16.mxu0 0
    %447 = vmatpush1.bf16.msra.mxu0 %v427
    %448 = vmatprep.subr.bf16.mxu0 0
    %449 = vmatpush1.bf16.msra.mxu0 %v428
    %450 = vmatprep.subr.bf16.mxu0 0
    %451 = vmatpush1.bf16.msra.mxu0 %v429
    %452 = vmatprep.subr.bf16.mxu0 0
    %453 = vmatpush1.bf16.msra.mxu0 %v430
    %454 = vmatprep.subr.bf16.mxu0 0
    %455 = vmatpush1.bf16.msra.mxu0 %v431
    %456 = vmatprep.subr.bf16.mxu0 0
    %457 = vmatpush1.bf16.msra.mxu0 0
    %458 = vmatprep.subr.bf16.mxu0 0
    %459 = vmatpush1.bf16.msra.mxu0 0
    %460 = vmatprep.subr.bf16.mxu0 0
    %461 = vmatpush1.bf16.msra.mxu0 0
    %462 = vmatprep.subr.bf16.mxu0 0
    %463 = vmatpush1.bf16.msra.mxu0 0
    %464 = vmatprep.subr.bf16.mxu0 0
    %465 = vmatpush1.bf16.msra.mxu0 0
    %466 = vmatprep.subr.bf16.mxu0 0
    %467 = vmatpush1.bf16.msra.mxu0 0
    %468 = vmatprep.subr.bf16.mxu0 0
    %469 = vmatpush1.bf16.msra.mxu0 0
    %470 = vmatprep.subr.bf16.mxu0 0
    %471 = vmatpush1.bf16.msra.mxu0 0
    %472 = vmatprep.mubr.bf16.mxu0 0
    %473 = vmatmul.mubr.bf16.gmra.mrb[0].mxu0 %v365
    %v474 = vpop.f32.mrb[0].mxu0
    %v475 = vadd.f32 %v390, %v474
    %v476 = vpop.f32.mrb[0].mxu0
    %v477 = vpop.f32.mrb[0].mxu0
    %v478 = vadd.f32 %v390, %v477
    %v479 = vpop.f32.mrb[0].mxu0
    %480 = vmatprep.mubr.bf16.mxu0 0
    %481 = vmatmul.mubr.bf16.gmra.mrb[0].mxu0 %v366
    %v482 = vpop.f32.mrb[0].mxu0
    %v483 = vadd.f32 %v390, %v482
    %v484 = vpop.f32.mrb[0].mxu0
    %v485 = vpop.f32.mrb[0].mxu0
    %v486 = vadd.f32 %v390, %v485
    %v487 = vpop.f32.mrb[0].mxu0
    %488 = vmatprep.mubr.bf16.mxu0 0
    %489 = vmatmul.mubr.bf16.gmra.mrb[0].mxu0 %v367
    %v490 = vpop.f32.mrb[0].mxu0
    %v491 = vadd.f32 %v390, %v490
    %v492 = vpop.f32.mrb[0].mxu0
    %v493 = vpop.f32.mrb[0].mxu0
    %v494 = vadd.f32 %v390, %v493
    %v495 = vpop.f32.mrb[0].mxu0
    %496 = vmatprep.mubr.bf16.mxu0 0
    %497 = vmatmul.mubr.bf16.gmra.mrb[0].mxu0 %v368
    %v498 = vpop.f32.mrb[0].mxu0
    %v499 = vadd.f32 %v390, %v498
    %v500 = vpop.f32.mrb[0].mxu0
    %v501 = vpop.f32.mrb[0].mxu0
    %v502 = vadd.f32 %v390, %v501
    %v503 = vpop.f32.mrb[0].mxu0
    %504 = vdwg.mxu0
    %v505 = vmul.f32 %v475, 0.01
    %v506 = vmul.f32 %v478, 0.01
    %v507 = vmul.f32 %v483, 0.01
    %v508 = vmul.f32 %v486, 0.01
    %v509 = vmul.f32 %v491, 0.01
    %v510 = vmul.f32 %v494, 0.01
    %v511 = vmul.f32 %v499, 0.01
    %v512 = vmul.f32 %v502, 0.01
    %v513 = vmax.f32 %v475, %v505
    %v514 = vmax.f32 %v478, %v506
    %v515 = vmax.f32 %v483, %v507
    %v516 = vmax.f32 %v486, %v508
    %v517 = vmax.f32 %v491, %v509
    %v518 = vmax.f32 %v494, %v510
    %v519 = vmax.f32 %v499, %v511
    %v520 = vmax.f32 %v502, %v512
    %v521 = vadd.f32 %v513, %v357
    %v522 = vadd.f32 %v514, %v358
    %v523 = vadd.f32 %v515, %v359
    %v524 = vadd.f32 %v516, %v360
    %v525 = vadd.f32 %v517, %v361
    %v526 = vadd.f32 %v518, %v362
    %v527 = vadd.f32 %v519, %v363
    %v528 = vadd.f32 %v520, %v364
    %v529 = vpack.c.bf16 %v522, %v521
    %v530 = vpack.c.bf16 %v524, %v523
    %v531 = vpack.c.bf16 %v526, %v525
    %v532 = vpack.c.bf16 %v528, %v527
    %v533 = vld [vmem:[#allocation11] sm:$0xf]
    %v534 = vld [vmem:[#allocation11 + $0x4] sm:$0xf]
    %v535 = vld [vmem:[#allocation11 + $0x8] sm:$0xf]
    %v536 = vld [vmem:[#allocation11 + $0xc] sm:$0xf]
    %v537 = vld [vmem:[#allocation11 + $0x10] sm:$0xf]
    %v538 = vld [vmem:[#allocation11 + $0x14] sm:$0xf]
    %v539 = vld [vmem:[#allocation11 + $0x18] sm:$0xf]
    %v540 = vld [vmem:[#allocation11 + $0x1c] sm:$0xf]
    %v541 = vld [vmem:[#allocation11 + $0x20] sm:$0xf]
    %v542 = vld [vmem:[#allocation11 + $0x24] sm:$0xf]
    %v543 = vld [vmem:[#allocation11 + $0x28] sm:$0xf]
    %v544 = vld [vmem:[#allocation11 + $0x2c] sm:$0xf]
    %v545 = vld [vmem:[#allocation11 + $0x30] sm:$0xf]
    %v546 = vld [vmem:[#allocation11 + $0x34] sm:$0xf]
    %v547 = vld [vmem:[#allocation11 + $0x38] sm:$0xf]
    %v548 = vld [vmem:[#allocation11 + $0x3c] sm:$0xf]
    %v549 = vld [vmem:[%s7] sm:$0x1]
    %v551 = vlaneseq
    %v552 = vshrl.u32 %v551, 7
    %v553 = vsub.s32 0, %v552
    %v554 = vrot.slane %v549, %v553
    %v572 = vunpack.c.l.b16 %v533
    %v573 = vunpack.c.l.b16 %v534
    %v574 = vunpack.c.l.b16 %v535
    %v575 = vunpack.c.l.b16 %v536
    %v576 = vunpack.c.l.b16 %v537
    %v577 = vunpack.c.l.b16 %v538
    %v578 = vunpack.c.l.b16 %v539
    %v579 = vunpack.c.l.b16 %v540
    %v580 = vunpack.c.l.b16 %v541
    %v581 = vunpack.c.l.b16 %v542
    %v582 = vunpack.c.l.b16 %v543
    %v583 = vunpack.c.l.b16 %v544
    %v584 = vunpack.c.l.b16 %v545
    %v585 = vunpack.c.l.b16 %v546
    %v586 = vunpack.c.l.b16 %v547
    %v587 = vunpack.c.l.b16 %v548
    %v588 = vpack.c.b16 %v573, %v572
    %v589 = vpack.c.b16 %v575, %v574
    %v590 = vpack.c.b16 %v577, %v576
    %v591 = vpack.c.b16 %v579, %v578
    %v592 = vpack.c.b16 %v581, %v580
    %v593 = vpack.c.b16 %v583, %v582
    %v594 = vpack.c.b16 %v585, %v584
    %v595 = vpack.c.b16 %v587, %v586
    %604 = vmatprep.subr.bf16.mxu0 0
    %605 = vmatpush1.bf16.msra.mxu0 %v588
    %606 = vmatprep.subr.bf16.mxu0 0
    %607 = vmatpush1.bf16.msra.mxu0 %v589
    %608 = vmatprep.subr.bf16.mxu0 0
    %609 = vmatpush1.bf16.msra.mxu0 %v590
    %610 = vmatprep.subr.bf16.mxu0 0
    %611 = vmatpush1.bf16.msra.mxu0 %v591
    %612 = vmatprep.subr.bf16.mxu0 0
    %613 = vmatpush1.bf16.msra.mxu0 %v592
    %614 = vmatprep.subr.bf16.mxu0 0
    %615 = vmatpush1.bf16.msra.mxu0 %v593
    %616 = vmatprep.subr.bf16.mxu0 0
    %617 = vmatpush1.bf16.msra.mxu0 %v594
    %618 = vmatprep.subr.bf16.mxu0 0
    %619 = vmatpush1.bf16.msra.mxu0 %v595
    %620 = vmatprep.subr.bf16.mxu0 0
    %621 = vmatpush1.bf16.msra.mxu0 0
    %622 = vmatprep.subr.bf16.mxu0 0
    %623 = vmatpush1.bf16.msra.mxu0 0
    %624 = vmatprep.subr.bf16.mxu0 0
    %625 = vmatpush1.bf16.msra.mxu0 0
    %626 = vmatprep.subr.bf16.mxu0 0
    %627 = vmatpush1.bf16.msra.mxu0 0
    %628 = vmatprep.subr.bf16.mxu0 0
    %629 = vmatpush1.bf16.msra.mxu0 0
    %630 = vmatprep.subr.bf16.mxu0 0
    %631 = vmatpush1.bf16.msra.mxu0 0
    %632 = vmatprep.subr.bf16.mxu0 0
    %633 = vmatpush1.bf16.msra.mxu0 0
    %634 = vmatprep.subr.bf16.mxu0 0
    %635 = vmatpush1.bf16.msra.mxu0 0
    %636 = vmatprep.mubr.bf16.mxu0 0
    %637 = vmatmul.mubr.bf16.gmra.mrb[0].mxu0 %v529
    %v638 = vpop.f32.mrb[0].mxu0
    %v639 = vadd.f32 %v554, %v638
    %v640 = vpop.f32.mrb[0].mxu0
    %v641 = vpop.f32.mrb[0].mxu0
    %v642 = vadd.f32 %v554, %v641
    %v643 = vpop.f32.mrb[0].mxu0
    %644 = vmatprep.mubr.bf16.mxu0 0
    %645 = vmatmul.mubr.bf16.gmra.mrb[0].mxu0 %v530
    %v646 = vpop.f32.mrb[0].mxu0
    %v647 = vadd.f32 %v554, %v646
    %v648 = vpop.f32.mrb[0].mxu0
    %v649 = vpop.f32.mrb[0].mxu0
    %v650 = vadd.f32 %v554, %v649
    %v651 = vpop.f32.mrb[0].mxu0
    %652 = vmatprep.mubr.bf16.mxu0 0
    %653 = vmatmul.mubr.bf16.gmra.mrb[0].mxu0 %v531
    %v654 = vpop.f32.mrb[0].mxu0
    %v655 = vadd.f32 %v554, %v654
    %v656 = vpop.f32.mrb[0].mxu0
    %v657 = vpop.f32.mrb[0].mxu0
    %v658 = vadd.f32 %v554, %v657
    %v659 = vpop.f32.mrb[0].mxu0
    %660 = vmatprep.mubr.bf16.mxu0 0
    %661 = vmatmul.mubr.bf16.gmra.mrb[0].mxu0 %v532
    %v662 = vpop.f32.mrb[0].mxu0
    %v663 = vadd.f32 %v554, %v662
    %v664 = vpop.f32.mrb[0].mxu0
    %v665 = vpop.f32.mrb[0].mxu0
    %v666 = vadd.f32 %v554, %v665
    %v667 = vpop.f32.mrb[0].mxu0
    %668 = vdwg.mxu0
    %v669 = vmul.f32 %v639, 0.01
    %v670 = vmul.f32 %v642, 0.01
    %v671 = vmul.f32 %v647, 0.01
    %v672 = vmul.f32 %v650, 0.01
    %v673 = vmul.f32 %v655, 0.01
    %v674 = vmul.f32 %v658, 0.01
    %v675 = vmul.f32 %v663, 0.01
    %v676 = vmul.f32 %v666, 0.01
    %v677 = vmax.f32 %v639, %v669
    %v678 = vmax.f32 %v642, %v670
    %v679 = vmax.f32 %v647, %v671
    %v680 = vmax.f32 %v650, %v672
    %v681 = vmax.f32 %v655, %v673
    %v682 = vmax.f32 %v658, %v674
    %v683 = vmax.f32 %v663, %v675
    %v684 = vmax.f32 %v666, %v676
    %v685 = vadd.f32 %v677, %v521
    %v686 = vadd.f32 %v678, %v522
    %v687 = vadd.f32 %v679, %v523
    %v688 = vadd.f32 %v680, %v524
    %v689 = vadd.f32 %v681, %v525
    %v690 = vadd.f32 %v682, %v526
    %v691 = vadd.f32 %v683, %v527
    %v692 = vadd.f32 %v684, %v528
    %vm693 = vcmask 1043456
    %v694 = vsel %vm693, %v685, 0.0
    %v695 = vrot.slane %v694, 4
    %v696 = vadd.f32 %v694, %v695
    %v697 = vrot.slane %v696, 2
    %v698 = vadd.f32 %v696, %v697
    %v699 = vrot.slane %v698, 1
    %v700 = vadd.f32 %v698, %v699
    %v701 = vsel %vm693, %v686, 0.0
    %v702 = vrot.slane %v701, 4
    %v703 = vadd.f32 %v701, %v702
    %v704 = vrot.slane %v703, 2
    %v705 = vadd.f32 %v703, %v704
    %v706 = vrot.slane %v705, 1
    %v707 = vadd.f32 %v705, %v706
    %v708 = vsel %vm693, %v687, 0.0
    %v709 = vrot.slane %v708, 4
    %v710 = vadd.f32 %v708, %v709
    %v711 = vrot.slane %v710, 2
    %v712 = vadd.f32 %v710, %v711
    %v713 = vrot.slane %v712, 1
    %v714 = vadd.f32 %v712, %v713
    %v715 = vsel %vm693, %v688, 0.0
    %v716 = vrot.slane %v715, 4
    %v717 = vadd.f32 %v715, %v716
    %v718 = vrot.slane %v717, 2
    %v719 = vadd.f32 %v717, %v718
    %v720 = vrot.slane %v719, 1
    %v721 = vadd.f32 %v719, %v720
    %v722 = vsel %vm693, %v689, 0.0
    %v723 = vrot.slane %v722, 4
    %v724 = vadd.f32 %v722, %v723
    %v725 = vrot.slane %v724, 2
    %v726 = vadd.f32 %v724, %v725
    %v727 = vrot.slane %v726, 1
    %v728 = vadd.f32 %v726, %v727
    %v729 = vsel %vm693, %v690, 0.0
    %v730 = vrot.slane %v729, 4
    %v731 = vadd.f32 %v729, %v730
    %v732 = vrot.slane %v731, 2
    %v733 = vadd.f32 %v731, %v732
    %v734 = vrot.slane %v733, 1
    %v735 = vadd.f32 %v733, %v734
    %v736 = vsel %vm693, %v691, 0.0
    %v737 = vrot.slane %v736, 4
    %v738 = vadd.f32 %v736, %v737
    %v739 = vrot.slane %v738, 2
    %v740 = vadd.f32 %v738, %v739
    %v741 = vrot.slane %v740, 1
    %v742 = vadd.f32 %v740, %v741
    %v743 = vsel %vm693, %v692, 0.0
    %v744 = vrot.slane %v743, 4
    %v745 = vadd.f32 %v743, %v744
    %v746 = vrot.slane %v745, 2
    %v747 = vadd.f32 %v745, %v746
    %v748 = vrot.slane %v747, 1
    %v749 = vadd.f32 %v747, %v748
    %v750 = vmul.f32 %v700, 0.25
    %v751 = vmul.f32 %v707, 0.25
    %v752 = vmul.f32 %v714, 0.25
    %v753 = vmul.f32 %v721, 0.25
    %v754 = vmul.f32 %v728, 0.25
    %v755 = vmul.f32 %v735, 0.25
    %v756 = vmul.f32 %v742, 0.25
    %v757 = vmul.f32 %v749, 0.25
    %v766 = vrot.slane %v685, 4
    %v767 = vrot.slane %v686, 4
    %v768 = vrot.slane %v687, 4
    %v769 = vrot.slane %v688, 4
    %v770 = vrot.slane %v689, 4
    %v771 = vrot.slane %v690, 4
    %v772 = vrot.slane %v691, 4
    %v773 = vrot.slane %v692, 4
    %v782 = vsel %vm693, %v766, 0.0
    %v783 = vrot.slane %v782, 4
    %v784 = vadd.f32 %v782, %v783
    %v785 = vrot.slane %v784, 2
    %v786 = vadd.f32 %v784, %v785
    %v787 = vrot.slane %v786, 1
    %v788 = vadd.f32 %v786, %v787
    %v789 = vsel %vm693, %v767, 0.0
    %v790 = vrot.slane %v789, 4
    %v791 = vadd.f32 %v789, %v790
    %v792 = vrot.slane %v791, 2
    %v793 = vadd.f32 %v791, %v792
    %v794 = vrot.slane %v793, 1
    %v795 = vadd.f32 %v793, %v794
    %v796 = vsel %vm693, %v768, 0.0
    %v797 = vrot.slane %v796, 4
    %v798 = vadd.f32 %v796, %v797
    %v799 = vrot.slane %v798, 2
    %v800 = vadd.f32 %v798, %v799
    %v801 = vrot.slane %v800, 1
    %v802 = vadd.f32 %v800, %v801
    %v803 = vsel %vm693, %v769, 0.0
    %v804 = vrot.slane %v803, 4
    %v805 = vadd.f32 %v803, %v804
    %v806 = vrot.slane %v805, 2
    %v807 = vadd.f32 %v805, %v806
    %v808 = vrot.slane %v807, 1
    %v809 = vadd.f32 %v807, %v808
    %v810 = vsel %vm693, %v770, 0.0
    %v811 = vrot.slane %v810, 4
    %v812 = vadd.f32 %v810, %v811
    %v813 = vrot.slane %v812, 2
    %v814 = vadd.f32 %v812, %v813
    %v815 = vrot.slane %v814, 1
    %v816 = vadd.f32 %v814, %v815
    %v817 = vsel %vm693, %v771, 0.0
    %v818 = vrot.slane %v817, 4
    %v819 = vadd.f32 %v817, %v818
    %v820 = vrot.slane %v819, 2
    %v821 = vadd.f32 %v819, %v820
    %v822 = vrot.slane %v821, 1
    %v823 = vadd.f32 %v821, %v822
    %v824 = vsel %vm693, %v772, 0.0
    %v825 = vrot.slane %v824, 4
    %v826 = vadd.f32 %v824, %v825
    %v827 = vrot.slane %v826, 2
    %v828 = vadd.f32 %v826, %v827
    %v829 = vrot.slane %v828, 1
    %v830 = vadd.f32 %v828, %v829
    %v831 = vsel %vm693, %v773, 0.0
    %v832 = vrot.slane %v831, 4
    %v833 = vadd.f32 %v831, %v832
    %v834 = vrot.slane %v833, 2
    %v835 = vadd.f32 %v833, %v834
    %v836 = vrot.slane %v835, 1
    %v837 = vadd.f32 %v835, %v836
    %v838 = vmul.f32 %v788, 0.25
    %v839 = vmul.f32 %v795, 0.25
    %v840 = vmul.f32 %v802, 0.25
    %v841 = vmul.f32 %v809, 0.25
    %v842 = vmul.f32 %v816, 0.25
    %v843 = vmul.f32 %v823, 0.25
    %v844 = vmul.f32 %v830, 0.25
    %v845 = vmul.f32 %v837, 0.25
    %v846 = vpack.c.bf16 %v750, %v750
    %v847 = vpack.c.bf16 %v751, %v751
    %v848 = vpack.c.bf16 %v752, %v752
    %v849 = vpack.c.bf16 %v753, %v753
    %v850 = vpack.c.bf16 %v754, %v754
    %v851 = vpack.c.bf16 %v755, %v755
    %v852 = vpack.c.bf16 %v756, %v756
    %v853 = vpack.c.bf16 %v757, %v757
    %v854 = vld [vmem:[#allocation12] sm:$0xf]
    %v855 = vld [vmem:[#allocation12 + $0x4] sm:$0xf]
    %v856 = vld [vmem:[#allocation12 + $0x8] sm:$0xf]
    %v857 = vld [vmem:[#allocation12 + $0xc] sm:$0xf]
    %v858 = vld [vmem:[#allocation12 + $0x10] sm:$0xf]
    %v859 = vld [vmem:[#allocation12 + $0x14] sm:$0xf]
    %v860 = vld [vmem:[#allocation12 + $0x18] sm:$0xf]
    %v861 = vld [vmem:[#allocation12 + $0x1c] sm:$0xf]
    %v862 = vld [vmem:[#allocation12 + $0x20] sm:$0xf]
    %v863 = vld [vmem:[#allocation12 + $0x24] sm:$0xf]
    %v864 = vld [vmem:[#allocation12 + $0x28] sm:$0xf]
    %v865 = vld [vmem:[#allocation12 + $0x2c] sm:$0xf]
    %v866 = vld [vmem:[#allocation12 + $0x30] sm:$0xf]
    %v867 = vld [vmem:[#allocation12 + $0x34] sm:$0xf]
    %v868 = vld [vmem:[#allocation12 + $0x38] sm:$0xf]
    %v869 = vld [vmem:[#allocation12 + $0x3c] sm:$0xf]
    %v870 = vpack.c.bf16 %v838, %v838
    %v871 = vpack.c.bf16 %v839, %v839
    %v872 = vpack.c.bf16 %v840, %v840
    %v873 = vpack.c.bf16 %v841, %v841
    %v874 = vpack.c.bf16 %v842, %v842
    %v875 = vpack.c.bf16 %v843, %v843
    %v876 = vpack.c.bf16 %v844, %v844
    %v877 = vpack.c.bf16 %v845, %v845
    %v878 = vld [vmem:[#allocation14] sm:$0xf]
    %v879 = vld [vmem:[#allocation14 + $0x4] sm:$0xf]
    %v880 = vld [vmem:[#allocation14 + $0x8] sm:$0xf]
    %v881 = vld [vmem:[#allocation14 + $0xc] sm:$0xf]
    %v882 = vld [vmem:[#allocation14 + $0x10] sm:$0xf]
    %v883 = vld [vmem:[#allocation14 + $0x14] sm:$0xf]
    %v884 = vld [vmem:[#allocation14 + $0x18] sm:$0xf]
    %v885 = vld [vmem:[#allocation14 + $0x1c] sm:$0xf]
    %v886 = vld [vmem:[#allocation14 + $0x20] sm:$0xf]
    %v887 = vld [vmem:[#allocation14 + $0x24] sm:$0xf]
    %v888 = vld [vmem:[#allocation14 + $0x28] sm:$0xf]
    %v889 = vld [vmem:[#allocation14 + $0x2c] sm:$0xf]
    %v890 = vld [vmem:[#allocation14 + $0x30] sm:$0xf]
    %v891 = vld [vmem:[#allocation14 + $0x34] sm:$0xf]
    %v892 = vld [vmem:[#allocation14 + $0x38] sm:$0xf]
    %v893 = vld [vmem:[#allocation14 + $0x3c] sm:$0xf]
    %v902 = vunpack.c.l.b16 %v870
    %v903 = vunpack.c.l.b16 %v871
    %v904 = vunpack.c.l.b16 %v872
    %v905 = vunpack.c.l.b16 %v873
    %v906 = vunpack.c.l.b16 %v874
    %v907 = vunpack.c.l.b16 %v875
    %v908 = vunpack.c.l.b16 %v876
    %v909 = vunpack.c.l.b16 %v877
    %vm910 = vcmask 1041409
    %v911 = vsel %vm910, %v903, %v902
    %vm912 = vcmask 1042434
    %v913 = vsel %vm912, %v904, %v911
    %vm914 = vcmask 1043459
    %v915 = vsel %vm914, %v905, %v913
    %vm916 = vcmask 1044484
    %v917 = vsel %vm916, %v906, %v915
    %vm918 = vcmask 1045509
    %v919 = vsel %vm918, %v907, %v917
    %vm920 = vcmask 1046534
    %v921 = vsel %vm920, %v908, %v919
    %vm922 = vcmask 1047559
    %v923 = vsel %vm922, %v909, %v921
    %v924 = vpack.c.b16 %v923, %v923
    %v942 = vunpack.c.l.b16 %v878
    %v943 = vunpack.c.l.b16 %v879
    %v944 = vunpack.c.l.b16 %v880
    %v945 = vunpack.c.l.b16 %v881
    %v946 = vunpack.c.l.b16 %v882
    %v947 = vunpack.c.l.b16 %v883
    %v948 = vunpack.c.l.b16 %v884
    %v949 = vunpack.c.l.b16 %v885
    %v950 = vunpack.c.l.b16 %v886
    %v951 = vunpack.c.l.b16 %v887
    %v952 = vunpack.c.l.b16 %v888
    %v953 = vunpack.c.l.b16 %v889
    %v954 = vunpack.c.l.b16 %v890
    %v955 = vunpack.c.l.b16 %v891
    %v956 = vunpack.c.l.b16 %v892
    %v957 = vunpack.c.l.b16 %v893
    %v958 = vpack.c.b16 %v943, %v942
    %v959 = vpack.c.b16 %v945, %v944
    %v960 = vpack.c.b16 %v947, %v946
    %v961 = vpack.c.b16 %v949, %v948
    %v962 = vpack.c.b16 %v951, %v950
    %v963 = vpack.c.b16 %v953, %v952
    %v964 = vpack.c.b16 %v955, %v954
    %v965 = vpack.c.b16 %v957, %v956
    %974 = vmatprep.subr.bf16.mxu0 0
    %975 = vmatpush1.bf16.msra.mxu0 %v958
    %976 = vmatprep.subr.bf16.mxu0 0
    %977 = vmatpush1.bf16.msra.mxu0 %v959
    %978 = vmatprep.subr.bf16.mxu0 0
    %979 = vmatpush1.bf16.msra.mxu0 %v960
    %980 = vmatprep.subr.bf16.mxu0 0
    %981 = vmatpush1.bf16.msra.mxu0 %v961
    %982 = vmatprep.subr.bf16.mxu0 0
    %983 = vmatpush1.bf16.msra.mxu0 %v962
    %984 = vmatprep.subr.bf16.mxu0 0
    %985 = vmatpush1.bf16.msra.mxu0 %v963
    %986 = vmatprep.subr.bf16.mxu0 0
    %987 = vmatpush1.bf16.msra.mxu0 %v964
    %988 = vmatprep.subr.bf16.mxu0 0
    %989 = vmatpush1.bf16.msra.mxu0 %v965
    %990 = vmatprep.subr.bf16.mxu0 0
    %991 = vmatpush1.bf16.msra.mxu0 0
    %992 = vmatprep.subr.bf16.mxu0 0
    %993 = vmatpush1.bf16.msra.mxu0 0
    %994 = vmatprep.subr.bf16.mxu0 0
    %995 = vmatpush1.bf16.msra.mxu0 0
    %996 = vmatprep.subr.bf16.mxu0 0
    %997 = vmatpush1.bf16.msra.mxu0 0
    %998 = vmatprep.subr.bf16.mxu0 0
    %999 = vmatpush1.bf16.msra.mxu0 0
    %1000 = vmatprep.subr.bf16.mxu0 0
    %1001 = vmatpush1.bf16.msra.mxu0 0
    %1002 = vmatprep.subr.bf16.mxu0 0
    %1003 = vmatpush1.bf16.msra.mxu0 0
    %1004 = vmatprep.subr.bf16.mxu0 0
    %1005 = vmatpush1.bf16.msra.mxu0 0
    %1006 = vmatprep.mubr.bf16.mxu0 0
    %1007 = vmatmul.mubr.bf16.gmra.mrb[0].mxu0 %v924
    %v1008 = vpop.f32.mrb[0].mxu0
    %v1009 = vadd.f32 0.0, %v1008
    %v1010 = vpop.f32.mrb[0].mxu0
    %v1011 = vpop.f32.mrb[0].mxu0
    %v1012 = vpop.f32.mrb[0].mxu0
    %1013 = vdwg.mxu0
    %v1022 = vunpack.c.l.b16 %v846
    %v1023 = vunpack.c.l.b16 %v847
    %v1024 = vunpack.c.l.b16 %v848
    %v1025 = vunpack.c.l.b16 %v849
    %v1026 = vunpack.c.l.b16 %v850
    %v1027 = vunpack.c.l.b16 %v851
    %v1028 = vunpack.c.l.b16 %v852
    %v1029 = vunpack.c.l.b16 %v853
    %v1030 = vsel %vm910, %v1023, %v1022
    %v1031 = vsel %vm912, %v1024, %v1030
    %v1032 = vsel %vm914, %v1025, %v1031
    %v1033 = vsel %vm916, %v1026, %v1032
    %v1034 = vsel %vm918, %v1027, %v1033
    %v1035 = vsel %vm920, %v1028, %v1034
    %v1036 = vsel %vm922, %v1029, %v1035
    %v1037 = vpack.c.b16 %v1036, %v1036
    %v1055 = vunpack.c.l.b16 %v854
    %v1056 = vunpack.c.l.b16 %v855
    %v1057 = vunpack.c.l.b16 %v856
    %v1058 = vunpack.c.l.b16 %v857
    %v1059 = vunpack.c.l.b16 %v858
    %v1060 = vunpack.c.l.b16 %v859
    %v1061 = vunpack.c.l.b16 %v860
    %v1062 = vunpack.c.l.b16 %v861
    %v1063 = vunpack.c.l.b16 %v862
    %v1064 = vunpack.c.l.b16 %v863
    %v1065 = vunpack.c.l.b16 %v864
    %v1066 = vunpack.c.l.b16 %v865
    %v1067 = vunpack.c.l.b16 %v866
    %v1068 = vunpack.c.l.b16 %v867
    %v1069 = vunpack.c.l.b16 %v868
    %v1070 = vunpack.c.l.b16 %v869
    %v1071 = vpack.c.b16 %v1056, %v1055
    %v1072 = vpack.c.b16 %v1058, %v1057
    %v1073 = vpack.c.b16 %v1060, %v1059
    %v1074 = vpack.c.b16 %v1062, %v1061
    %v1075 = vpack.c.b16 %v1064, %v1063
    %v1076 = vpack.c.b16 %v1066, %v1065
    %v1077 = vpack.c.b16 %v1068, %v1067
    %v1078 = vpack.c.b16 %v1070, %v1069
    %1087 = vmatprep.subr.bf16.mxu0 0
    %1088 = vmatpush1.bf16.msra.mxu0 %v1071
    %1089 = vmatprep.subr.bf16.mxu0 0
    %1090 = vmatpush1.bf16.msra.mxu0 %v1072
    %1091 = vmatprep.subr.bf16.mxu0 0
    %1092 = vmatpush1.bf16.msra.mxu0 %v1073
    %1093 = vmatprep.subr.bf16.mxu0 0
    %1094 = vmatpush1.bf16.msra.mxu0 %v1074
    %1095 = vmatprep.subr.bf16.mxu0 0
    %1096 = vmatpush1.bf16.msra.mxu0 %v1075
    %1097 = vmatprep.subr.bf16.mxu0 0
    %1098 = vmatpush1.bf16.msra.mxu0 %v1076
    %1099 = vmatprep.subr.bf16.mxu0 0
    %1100 = vmatpush1.bf16.msra.mxu0 %v1077
    %1101 = vmatprep.subr.bf16.mxu0 0
    %1102 = vmatpush1.bf16.msra.mxu0 %v1078
    %1103 = vmatprep.subr.bf16.mxu0 0
    %1104 = vmatpush1.bf16.msra.mxu0 0
    %1105 = vmatprep.subr.bf16.mxu0 0
    %1106 = vmatpush1.bf16.msra.mxu0 0
    %1107 = vmatprep.subr.bf16.mxu0 0
    %1108 = vmatpush1.bf16.msra.mxu0 0
    %1109 = vmatprep.subr.bf16.mxu0 0
    %1110 = vmatpush1.bf16.msra.mxu0 0
    %1111 = vmatprep.subr.bf16.mxu0 0
    %1112 = vmatpush1.bf16.msra.mxu0 0
    %1113 = vmatprep.subr.bf16.mxu0 0
    %1114 = vmatpush1.bf16.msra.mxu0 0
    %1115 = vmatprep.subr.bf16.mxu0 0
    %1116 = vmatpush1.bf16.msra.mxu0 0
    %1117 = vmatprep.subr.bf16.mxu0 0
    %1118 = vmatpush1.bf16.msra.mxu0 0
    %1119 = vmatprep.mubr.bf16.mxu0 0
    %1120 = vmatmul.mubr.bf16.gmra.mrb[0].mxu0 %v1037
    %v1121 = vpop.f32.mrb[0].mxu0
    %v1122 = vadd.f32 %v1009, %v1121
    %v1123 = vpop.f32.mrb[0].mxu0
    %v1124 = vpop.f32.mrb[0].mxu0
    %v1125 = vpop.f32.mrb[0].mxu0
    %1126 = vdwg.mxu0
    %v1127 = vld [vmem:[%s10] sm:$0x1]
    %v1129 = vlaneseq
    %v1130 = vshrl.u32 %v1129, 7
    %v1131 = vsub.s32 0, %v1130
    %v1132 = vrot.slane %v1127, %v1131
    %v1134 = vadd.f32 %v1122, %v1132
    %v1135 = vld [vmem:[#allocation6] sm:$0xff]
    %v1136 = vpack.c.bf16 %v1134, %v1134
    %v1137 = vpack.c.bf16 %v1135, %v1135
    %v1138 = vld [vmem:[#allocation15] sm:$0xff]
    %v1139 = vld [vmem:[#allocation15 + $0x8] sm:$0xff]
    %v1140 = vld [vmem:[#allocation15 + $0x10] sm:$0xff]
    %v1141 = vld [vmem:[#allocation15 + $0x18] sm:$0xff]
    %v1142 = vld [vmem:[#allocation15 + $0x20] sm:$0xff]
    %v1143 = vld [vmem:[#allocation15 + $0x28] sm:$0xff]
    %v1144 = vld [vmem:[#allocation15 + $0x30] sm:$0xff]
    %v1145 = vld [vmem:[#allocation15 + $0x38] sm:$0xff]
    %v1146 = vld [vmem:[#allocation15 + $0x40] sm:$0xff]
    %v1147 = vld [vmem:[#allocation15 + $0x48] sm:$0xff]
    %v1148 = vld [vmem:[#allocation15 + $0x50] sm:$0xff]
    %v1149 = vld [vmem:[#allocation15 + $0x58] sm:$0xff]
    %v1150 = vld [vmem:[#allocation15 + $0x60] sm:$0xff]
    %v1151 = vld [vmem:[#allocation15 + $0x68] sm:$0xff]
    %v1152 = vld [vmem:[#allocation15 + $0x70] sm:$0xff]
    %v1153 = vld [vmem:[#allocation15 + $0x78] sm:$0xff]
    %v1154 = vld [vmem:[#allocation15 + $0x80] sm:$0xff]
    %v1155 = vld [vmem:[#allocation15 + $0x88] sm:$0xff]
    %v1156 = vld [vmem:[#allocation15 + $0x90] sm:$0xff]
    %v1157 = vld [vmem:[#allocation15 + $0x98] sm:$0xff]
    %v1158 = vld [vmem:[#allocation15 + $0xa0] sm:$0xff]
    %v1159 = vld [vmem:[#allocation15 + $0xa8] sm:$0xff]
    %v1160 = vld [vmem:[#allocation15 + $0xb0] sm:$0xff]
    %v1161 = vld [vmem:[#allocation15 + $0xb8] sm:$0xff]
    %v1162 = vld [vmem:[#allocation15 + $0xc0] sm:$0xff]
    %v1163 = vld [vmem:[#allocation15 + $0xc8] sm:$0xff]
    %v1164 = vld [vmem:[#allocation15 + $0xd0] sm:$0xff]
    %v1165 = vld [vmem:[#allocation15 + $0xd8] sm:$0xff]
    %v1166 = vld [vmem:[#allocation15 + $0xe0] sm:$0xff]
    %v1167 = vld [vmem:[#allocation15 + $0xe8] sm:$0xff]
    %v1168 = vld [vmem:[#allocation15 + $0xf0] sm:$0xff]
    %v1169 = vld [vmem:[#allocation15 + $0xf8] sm:$0xff]
    %v1170 = vld [vmem:[%s12] sm:$0x3]
    %v1172 = vlaneseq
    %v1173 = vshrl.u32 %v1172, 7
    %v1174 = vsub.s32 0, %v1173
    %v1175 = vrot.slane %v1170, %v1174
    %v1176 = vlaneseq
    %v1177 = vshrl.u32 %v1176, 7
    %v1178 = vsub.s32 1, %v1177
    %v1179 = vrot.slane %v1170, %v1178
    %v1214 = vunpack.c.l.b16 %v1138
    %v1215 = vunpack.c.h.b16 %v1138
    %v1216 = vunpack.c.l.b16 %v1139
    %v1217 = vunpack.c.h.b16 %v1139
    %v1218 = vunpack.c.l.b16 %v1140
    %v1219 = vunpack.c.h.b16 %v1140
    %v1220 = vunpack.c.l.b16 %v1141
    %v1221 = vunpack.c.h.b16 %v1141
    %v1222 = vunpack.c.l.b16 %v1142
    %v1223 = vunpack.c.h.b16 %v1142
    %v1224 = vunpack.c.l.b16 %v1143
    %v1225 = vunpack.c.h.b16 %v1143
    %v1226 = vunpack.c.l.b16 %v1144
    %v1227 = vunpack.c.h.b16 %v1144
    %v1228 = vunpack.c.l.b16 %v1145
    %v1229 = vunpack.c.h.b16 %v1145
    %v1230 = vunpack.c.l.b16 %v1146
    %v1231 = vunpack.c.h.b16 %v1146
    %v1232 = vunpack.c.l.b16 %v1147
    %v1233 = vunpack.c.h.b16 %v1147
    %v1234 = vunpack.c.l.b16 %v1148
    %v1235 = vunpack.c.h.b16 %v1148
    %v1236 = vunpack.c.l.b16 %v1149
    %v1237 = vunpack.c.h.b16 %v1149
    %v1238 = vunpack.c.l.b16 %v1150
    %v1239 = vunpack.c.h.b16 %v1150
    %v1240 = vunpack.c.l.b16 %v1151
    %v1241 = vunpack.c.h.b16 %v1151
    %v1242 = vunpack.c.l.b16 %v1152
    %v1243 = vunpack.c.h.b16 %v1152
    %v1244 = vunpack.c.l.b16 %v1153
    %v1245 = vunpack.c.h.b16 %v1153
    %v1246 = vunpack.c.l.b16 %v1154
    %v1247 = vunpack.c.h.b16 %v1154
    %v1248 = vunpack.c.l.b16 %v1155
    %v1249 = vunpack.c.h.b16 %v1155
    %v1250 = vunpack.c.l.b16 %v1156
    %v1251 = vunpack.c.h.b16 %v1156
    %v1252 = vunpack.c.l.b16 %v1157
    %v1253 = vunpack.c.h.b16 %v1157
    %v1254 = vunpack.c.l.b16 %v1158
    %v1255 = vunpack.c.h.b16 %v1158
    %v1256 = vunpack.c.l.b16 %v1159
    %v1257 = vunpack.c.h.b16 %v1159
    %v1258 = vunpack.c.l.b16 %v1160
    %v1259 = vunpack.c.h.b16 %v1160
    %v1260 = vunpack.c.l.b16 %v1161
    %v1261 = vunpack.c.h.b16 %v1161
    %v1262 = vunpack.c.l.b16 %v1162
    %v1263 = vunpack.c.h.b16 %v1162
    %v1264 = vunpack.c.l.b16 %v1163
    %v1265 = vunpack.c.h.b16 %v1163
    %v1266 = vunpack.c.l.b16 %v1164
    %v1267 = vunpack.c.h.b16 %v1164
    %v1268 = vunpack.c.l.b16 %v1165
    %v1269 = vunpack.c.h.b16 %v1165
    %v1270 = vunpack.c.l.b16 %v1166
    %v1271 = vunpack.c.h.b16 %v1166
    %v1272 = vunpack.c.l.b16 %v1167
    %v1273 = vunpack.c.h.b16 %v1167
    %v1274 = vunpack.c.l.b16 %v1168
    %v1275 = vunpack.c.h.b16 %v1168
    %v1276 = vunpack.c.l.b16 %v1169
    %v1277 = vunpack.c.h.b16 %v1169
    %v1278 = vpack.c.b16 %v1216, %v1214
    %v1279 = vpack.c.b16 %v1217, %v1215
    %v1280 = vpack.c.b16 %v1220, %v1218
    %v1281 = vpack.c.b16 %v1221, %v1219
    %v1282 = vpack.c.b16 %v1224, %v1222
    %v1283 = vpack.c.b16 %v1225, %v1223
    %v1284 = vpack.c.b16 %v1228, %v1226
    %v1285 = vpack.c.b16 %v1229, %v1227
    %v1286 = vpack.c.b16 %v1232, %v1230
    %v1287 = vpack.c.b16 %v1233, %v1231
    %v1288 = vpack.c.b16 %v1236, %v1234
    %v1289 = vpack.c.b16 %v1237, %v1235
    %v1290 = vpack.c.b16 %v1240, %v1238
    %v1291 = vpack.c.b16 %v1241, %v1239
    %v1292 = vpack.c.b16 %v1244, %v1242
    %v1293 = vpack.c.b16 %v1245, %v1243
    %v1294 = vpack.c.b16 %v1248, %v1246
    %v1295 = vpack.c.b16 %v1249, %v1247
    %v1296 = vpack.c.b16 %v1252, %v1250
    %v1297 = vpack.c.b16 %v1253, %v1251
    %v1298 = vpack.c.b16 %v1256, %v1254
    %v1299 = vpack.c.b16 %v1257, %v1255
    %v1300 = vpack.c.b16 %v1260, %v1258
    %v1301 = vpack.c.b16 %v1261, %v1259
    %v1302 = vpack.c.b16 %v1264, %v1262
    %v1303 = vpack.c.b16 %v1265, %v1263
    %v1304 = vpack.c.b16 %v1268, %v1266
    %v1305 = vpack.c.b16 %v1269, %v1267
    %v1306 = vpack.c.b16 %v1272, %v1270
    %v1307 = vpack.c.b16 %v1273, %v1271
    %v1308 = vpack.c.b16 %v1276, %v1274
    %v1309 = vpack.c.b16 %v1277, %v1275
    %1342 = vmatprep.subr.bf16.mxu0 %v1279
    %1343 = vmatpush1.bf16.msra.mxu0 %v1278
    %1344 = vmatprep.subr.bf16.mxu0 %v1281
    %1345 = vmatpush1.bf16.msra.mxu0 %v1280
    %1346 = vmatprep.subr.bf16.mxu0 %v1283
    %1347 = vmatpush1.bf16.msra.mxu0 %v1282
    %1348 = vmatprep.subr.bf16.mxu0 %v1285
    %1349 = vmatpush1.bf16.msra.mxu0 %v1284
    %1350 = vmatprep.subr.bf16.mxu0 %v1287
    %1351 = vmatpush1.bf16.msra.mxu0 %v1286
    %1352 = vmatprep.subr.bf16.mxu0 %v1289
    %1353 = vmatpush1.bf16.msra.mxu0 %v1288
    %1354 = vmatprep.subr.bf16.mxu0 %v1291
    %1355 = vmatpush1.bf16.msra.mxu0 %v1290
    %1356 = vmatprep.subr.bf16.mxu0 %v1293
    %1357 = vmatpush1.bf16.msra.mxu0 %v1292
    %1358 = vmatprep.subr.bf16.mxu0 %v1295
    %1359 = vmatpush1.bf16.msra.mxu0 %v1294
    %1360 = vmatprep.subr.bf16.mxu0 %v1297
    %1361 = vmatpush1.bf16.msra.mxu0 %v1296
    %1362 = vmatprep.subr.bf16.mxu0 %v1299
    %1363 = vmatpush1.bf16.msra.mxu0 %v1298
    %1364 = vmatprep.subr.bf16.mxu0 %v1301
    %1365 = vmatpush1.bf16.msra.mxu0 %v1300
    %1366 = vmatprep.subr.bf16.mxu0 %v1303
    %1367 = vmatpush1.bf16.msra.mxu0 %v1302
    %1368 = vmatprep.subr.bf16.mxu0 %v1305
    %1369 = vmatpush1.bf16.msra.mxu0 %v1304
    %1370 = vmatprep.subr.bf16.mxu0 %v1307
    %1371 = vmatpush1.bf16.msra.mxu0 %v1306
    %1372 = vmatprep.subr.bf16.mxu0 %v1309
    %1373 = vmatpush1.bf16.msra.mxu0 %v1308
    %1374 = vmatprep.mubr.bf16.mxu0 %v1137
    %1375 = vmatmul.mubr.bf16.gmra.mrb[0].mxu0 %v1136
    %v1376 = vpop.f32.mrb[0].mxu0
    %v1377 = vadd.f32 %v1175, %v1376
    %v1378 = vpop.f32.mrb[0].mxu0
    %v1379 = vadd.f32 %v1179, %v1378
    %v1380 = vpop.f32.mrb[0].mxu0
    %v1381 = vpop.f32.mrb[0].mxu0
    %1382 = vdwg.mxu0
    %v1383 = vmul.f32 %v1377, 0.01
    %v1384 = vmul.f32 %v1379, 0.01
    %v1385 = vmax.f32 %v1377, %v1383
    %v1386 = vmax.f32 %v1379, %v1384
    %v1387 = vadd.f32 %v1385, %v1134
    %v1388 = vadd.f32 %v1386, %v1135
    %v1389 = vpack.c.bf16 %v1387, %v1387
    %v1390 = vpack.c.bf16 %v1388, %v1388
    %v1391 = vld [vmem:[#allocation17] sm:$0xff]
    %v1392 = vld [vmem:[#allocation17 + $0x8] sm:$0xff]
    %v1393 = vld [vmem:[#allocation17 + $0x10] sm:$0xff]
    %v1394 = vld [vmem:[#allocation17 + $0x18] sm:$0xff]
    %v1395 = vld [vmem:[#allocation17 + $0x20] sm:$0xff]
    %v1396 = vld [vmem:[#allocation17 + $0x28] sm:$0xff]
    %v1397 = vld [vmem:[#allocation17 + $0x30] sm:$0xff]
    %v1398 = vld [vmem:[#allocation17 + $0x38] sm:$0xff]
    %v1399 = vld [vmem:[#allocation17 + $0x40] sm:$0xff]
    %v1400 = vld [vmem:[#allocation17 + $0x48] sm:$0xff]
    %v1401 = vld [vmem:[#allocation17 + $0x50] sm:$0xff]
    %v1402 = vld [vmem:[#allocation17 + $0x58] sm:$0xff]
    %v1403 = vld [vmem:[#allocation17 + $0x60] sm:$0xff]
    %v1404 = vld [vmem:[#allocation17 + $0x68] sm:$0xff]
    %v1405 = vld [vmem:[#allocation17 + $0x70] sm:$0xff]
    %v1406 = vld [vmem:[#allocation17 + $0x78] sm:$0xff]
    %v1407 = vld [vmem:[#allocation17 + $0x80] sm:$0xff]
    %v1408 = vld [vmem:[#allocation17 + $0x88] sm:$0xff]
    %v1409 = vld [vmem:[#allocation17 + $0x90] sm:$0xff]
    %v1410 = vld [vmem:[#allocation17 + $0x98] sm:$0xff]
    %v1411 = vld [vmem:[#allocation17 + $0xa0] sm:$0xff]
    %v1412 = vld [vmem:[#allocation17 + $0xa8] sm:$0xff]
    %v1413 = vld [vmem:[#allocation17 + $0xb0] sm:$0xff]
    %v1414 = vld [vmem:[#allocation17 + $0xb8] sm:$0xff]
    %v1415 = vld [vmem:[#allocation17 + $0xc0] sm:$0xff]
    %v1416 = vld [vmem:[#allocation17 + $0xc8] sm:$0xff]
    %v1417 = vld [vmem:[#allocation17 + $0xd0] sm:$0xff]
    %v1418 = vld [vmem:[#allocation17 + $0xd8] sm:$0xff]
    %v1419 = vld [vmem:[#allocation17 + $0xe0] sm:$0xff]
    %v1420 = vld [vmem:[#allocation17 + $0xe8] sm:$0xff]
    %v1421 = vld [vmem:[#allocation17 + $0xf0] sm:$0xff]
    %v1422 = vld [vmem:[#allocation17 + $0xf8] sm:$0xff]
    %v1423 = vld [vmem:[%s14] sm:$0x3]
    %v1425 = vlaneseq
    %v1426 = vshrl.u32 %v1425, 7
    %v1427 = vsub.s32 0, %v1426
    %v1428 = vrot.slane %v1423, %v1427
    %v1429 = vlaneseq
    %v1430 = vshrl.u32 %v1429, 7
    %v1431 = vsub.s32 1, %v1430
    %v1432 = vrot.slane %v1423, %v1431
    %v1467 = vunpack.c.l.b16 %v1391
    %v1468 = vunpack.c.h.b16 %v1391
    %v1469 = vunpack.c.l.b16 %v1392
    %v1470 = vunpack.c.h.b16 %v1392
    %v1471 = vunpack.c.l.b16 %v1393
    %v1472 = vunpack.c.h.b16 %v1393
    %v1473 = vunpack.c.l.b16 %v1394
    %v1474 = vunpack.c.h.b16 %v1394
    %v1475 = vunpack.c.l.b16 %v1395
    %v1476 = vunpack.c.h.b16 %v1395
    %v1477 = vunpack.c.l.b16 %v1396
    %v1478 = vunpack.c.h.b16 %v1396
    %v1479 = vunpack.c.l.b16 %v1397
    %v1480 = vunpack.c.h.b16 %v1397
    %v1481 = vunpack.c.l.b16 %v1398
    %v1482 = vunpack.c.h.b16 %v1398
    %v1483 = vunpack.c.l.b16 %v1399
    %v1484 = vunpack.c.h.b16 %v1399
    %v1485 = vunpack.c.l.b16 %v1400
    %v1486 = vunpack.c.h.b16 %v1400
    %v1487 = vunpack.c.l.b16 %v1401
    %v1488 = vunpack.c.h.b16 %v1401
    %v1489 = vunpack.c.l.b16 %v1402
    %v1490 = vunpack.c.h.b16 %v1402
    %v1491 = vunpack.c.l.b16 %v1403
    %v1492 = vunpack.c.h.b16 %v1403
    %v1493 = vunpack.c.l.b16 %v1404
    %v1494 = vunpack.c.h.b16 %v1404
    %v1495 = vunpack.c.l.b16 %v1405
    %v1496 = vunpack.c.h.b16 %v1405
    %v1497 = vunpack.c.l.b16 %v1406
    %v1498 = vunpack.c.h.b16 %v1406
    %v1499 = vunpack.c.l.b16 %v1407
    %v1500 = vunpack.c.h.b16 %v1407
    %v1501 = vunpack.c.l.b16 %v1408
    %v1502 = vunpack.c.h.b16 %v1408
    %v1503 = vunpack.c.l.b16 %v1409
    %v1504 = vunpack.c.h.b16 %v1409
    %v1505 = vunpack.c.l.b16 %v1410
    %v1506 = vunpack.c.h.b16 %v1410
    %v1507 = vunpack.c.l.b16 %v1411
    %v1508 = vunpack.c.h.b16 %v1411
    %v1509 = vunpack.c.l.b16 %v1412
    %v1510 = vunpack.c.h.b16 %v1412
    %v1511 = vunpack.c.l.b16 %v1413
    %v1512 = vunpack.c.h.b16 %v1413
    %v1513 = vunpack.c.l.b16 %v1414
    %v1514 = vunpack.c.h.b16 %v1414
    %v1515 = vunpack.c.l.b16 %v1415
    %v1516 = vunpack.c.h.b16 %v1415
    %v1517 = vunpack.c.l.b16 %v1416
    %v1518 = vunpack.c.h.b16 %v1416
    %v1519 = vunpack.c.l.b16 %v1417
    %v1520 = vunpack.c.h.b16 %v1417
    %v1521 = vunpack.c.l.b16 %v1418
    %v1522 = vunpack.c.h.b16 %v1418
    %v1523 = vunpack.c.l.b16 %v1419
    %v1524 = vunpack.c.h.b16 %v1419
    %v1525 = vunpack.c.l.b16 %v1420
    %v1526 = vunpack.c.h.b16 %v1420
    %v1527 = vunpack.c.l.b16 %v1421
    %v1528 = vunpack.c.h.b16 %v1421
    %v1529 = vunpack.c.l.b16 %v1422
    %v1530 = vunpack.c.h.b16 %v1422
    %v1531 = vpack.c.b16 %v1469, %v1467
    %v1532 = vpack.c.b16 %v1470, %v1468
    %v1533 = vpack.c.b16 %v1473, %v1471
    %v1534 = vpack.c.b16 %v1474, %v1472
    %v1535 = vpack.c.b16 %v1477, %v1475
    %v1536 = vpack.c.b16 %v1478, %v1476
    %v1537 = vpack.c.b16 %v1481, %v1479
    %v1538 = vpack.c.b16 %v1482, %v1480
    %v1539 = vpack.c.b16 %v1485, %v1483
    %v1540 = vpack.c.b16 %v1486, %v1484
    %v1541 = vpack.c.b16 %v1489, %v1487
    %v1542 = vpack.c.b16 %v1490, %v1488
    %v1543 = vpack.c.b16 %v1493, %v1491
    %v1544 = vpack.c.b16 %v1494, %v1492
    %v1545 = vpack.c.b16 %v1497, %v1495
    %v1546 = vpack.c.b16 %v1498, %v1496
    %v1547 = vpack.c.b16 %v1501, %v1499
    %v1548 = vpack.c.b16 %v1502, %v1500
    %v1549 = vpack.c.b16 %v1505, %v1503
    %v1550 = vpack.c.b16 %v1506, %v1504
    %v1551 = vpack.c.b16 %v1509, %v1507
    %v1552 = vpack.c.b16 %v1510, %v1508
    %v1553 = vpack.c.b16 %v1513, %v1511
    %v1554 = vpack.c.b16 %v1514, %v1512
    %v1555 = vpack.c.b16 %v1517, %v1515
    %v1556 = vpack.c.b16 %v1518, %v1516
    %v1557 = vpack.c.b16 %v1521, %v1519
    %v1558 = vpack.c.b16 %v1522, %v1520
    %v1559 = vpack.c.b16 %v1525, %v1523
    %v1560 = vpack.c.b16 %v1526, %v1524
    %v1561 = vpack.c.b16 %v1529, %v1527
    %v1562 = vpack.c.b16 %v1530, %v1528
    %1595 = vmatprep.subr.bf16.mxu0 %v1532
    %1596 = vmatpush1.bf16.msra.mxu0 %v1531
    %1597 = vmatprep.subr.bf16.mxu0 %v1534
    %1598 = vmatpush1.bf16.msra.mxu0 %v1533
    %1599 = vmatprep.subr.bf16.mxu0 %v1536
    %1600 = vmatpush1.bf16.msra.mxu0 %v1535
    %1601 = vmatprep.subr.bf16.mxu0 %v1538
    %1602 = vmatpush1.bf16.msra.mxu0 %v1537
    %1603 = vmatprep.subr.bf16.mxu0 %v1540
    %1604 = vmatpush1.bf16.msra.mxu0 %v1539
    %1605 = vmatprep.subr.bf16.mxu0 %v1542
    %1606 = vmatpush1.bf16.msra.mxu0 %v1541
    %1607 = vmatprep.subr.bf16.mxu0 %v1544
    %1608 = vmatpush1.bf16.msra.mxu0 %v1543
    %1609 = vmatprep.subr.bf16.mxu0 %v1546
    %1610 = vmatpush1.bf16.msra.mxu0 %v1545
    %1611 = vmatprep.subr.bf16.mxu0 %v1548
    %1612 = vmatpush1.bf16.msra.mxu0 %v1547
    %1613 = vmatprep.subr.bf16.mxu0 %v1550
    %1614 = vmatpush1.bf16.msra.mxu0 %v1549
    %1615 = vmatprep.subr.bf16.mxu0 %v1552
    %1616 = vmatpush1.bf16.msra.mxu0 %v1551
    %1617 = vmatprep.subr.bf16.mxu0 %v1554
    %1618 = vmatpush1.bf16.msra.mxu0 %v1553
    %1619 = vmatprep.subr.bf16.mxu0 %v1556
    %1620 = vmatpush1.bf16.msra.mxu0 %v1555
    %1621 = vmatprep.subr.bf16.mxu0 %v1558
    %1622 = vmatpush1.bf16.msra.mxu0 %v1557
    %1623 = vmatprep.subr.bf16.mxu0 %v1560
    %1624 = vmatpush1.bf16.msra.mxu0 %v1559
    %1625 = vmatprep.subr.bf16.mxu0 %v1562
    %1626 = vmatpush1.bf16.msra.mxu0 %v1561
    %1627 = vmatprep.mubr.bf16.mxu0 %v1390
    %1628 = vmatmul.mubr.bf16.gmra.mrb[0].mxu0 %v1389
    %v1629 = vpop.f32.mrb[0].mxu0
    %v1630 = vadd.f32 %v1428, %v1629
    %v1631 = vpop.f32.mrb[0].mxu0
    %v1632 = vadd.f32 %v1432, %v1631
    %v1633 = vpop.f32.mrb[0].mxu0
    %v1634 = vpop.f32.mrb[0].mxu0
    %1635 = vdwg.mxu0
    %v1636 = vmul.f32 %v1630, 0.01
    %v1637 = vmul.f32 %v1632, 0.01
    %v1638 = vmax.f32 %v1630, %v1636
    %v1639 = vmax.f32 %v1632, %v1637
    %v1640 = vadd.f32 %v1638, %v1387
    %v1641 = vadd.f32 %v1639, %v1388
    %v1642 = vld [vmem:[%s15] sm:$0x3]
    %v1644 = vlaneseq
    %v1645 = vshrl.u32 %v1644, 7
    %v1646 = vsub.s32 0, %v1645
    %v1647 = vrot.slane %v1642, %v1646
    %v1648 = vlaneseq
    %v1649 = vshrl.u32 %v1648, 7
    %v1650 = vsub.s32 1, %v1649
    %v1651 = vrot.slane %v1642, %v1650
    %v1654 = vmul.f32 %v1640, %v1647
    %v1655 = vmul.f32 %v1641, %v1651
    %v1656 = vadd.f32 %v1654, %v1655
    %1657 = vadd.xlane.f32.xlu0 %v1656
    %v1658 = vpop.xlane.xlu0 %1657
    %s1659 = sld [smem:[#allocation2]]
    %v1660 = vstv %s1659
    %v1661 = vadd.f32 %v1658, %v1660
    %v1663 = vlaneseq
    %v1664 = vand.u32 %v1663, 127
    %v1665 = vlaneseq
    %v1666 = vshrl.u32 %v1665, 7
    %v1667 = vsub.s32 %v1664, %v1666
    %v1668 = vrot.slane %v1661, %v1667
    %vm1670 = vcmask 57344
    %1671 = vst.msk [vmem:[#allocation18] sm:$0x1] %vm1670, %v1668
    // Predicated region
    $region106: #{tpu_custom_call.1} parent=1 // pred_check
      _
    $region107: #{tpu_custom_call.1} parent=1 // pred_check_branch
      %1673 = sbr.rel (0) target = $region109
    $region108: #{tpu_custom_call.1} parent=1 // pred_region
      %s1675 = ssub.s32 16, 16
      %1676 = vsyncadd [#allocation5], %s1675
      %s1678 = sshll.u32 [#allocation18], 4
      %s1679 = int_to_ptr.vmem [resolvable:$true] %s1678
      %1681 = dma.vmem_to_hbm [thread:$0]  %s1679, 16, %s17, [#allocation5]
    $region109: #{tpu_custom_call.1} parent=1 // pred_fallthru
      _
    // Predicated region
    $region110: #{tpu_custom_call.1} parent=1 // pred_check
      _
    $region111: #{tpu_custom_call.1} parent=1 // pred_check_branch
      %1683 = sbr.rel (0) target = $region113
    $region112: #{tpu_custom_call.1} parent=1 // pred_region
      %1684 = dma.done [#allocation5], 16
    $region113: #{tpu_custom_call.1} parent=1 // pred_fallthru
      _
    %1685 = vsyncpa [#allocation4], 1
    %1686 = vsyncpa [#allocation7], 1
    %1687 = vsyncpa [#allocation10], 1
    %1688 = vsyncpa [#allocation13], 1
    %1689 = vsyncpa [#allocation16], 1
    %1690 = vsyncpa [#allocation5], 1

</llo_original>
